<compile_context>
chip_gen: v7x
topology: tpu7x:2x2x1
jax: 0.10.0
libtpu: 0.0.40
codegen_flags: <defaults>
</compile_context>

<pallas_src>
import jax
import jax.numpy as jnp
from jax.experimental import pallas as pl
from jax.experimental.pallas import tpu as pltpu


def _cross_attention_kernel(anchor_ref, neighbor_ref,
                            wq_ref, bq_ref,
                            wkv_ref, bkv_ref,
                            wo_ref, bo_ref,
                            mh_ref, eh_ref,
                            out_ref):
    tm, D = anchor_ref.shape
    k = neighbor_ref.shape[0]

    # Hoist all parameter loads (no re-broadcast inside the neighbor loop).
    a = anchor_ref[...]                       # (tm, D)
    wq = wq_ref[...]                          # (D, D)
    bq = bq_ref[...]                          # (1, D)
    wkv = wkv_ref[...]                        # (D, 2D) = [Wk | Wv]
    bkv = bkv_ref[...]                        # (1, 2D) = [bk | bv]
    wo = wo_ref[...]                          # (D, D)
    bo = bo_ref[...]                          # (1, D)
    mh = mh_ref[...]                          # (D, H) block-diag ones / sqrt(Dh)
    eh = eh_ref[...]                          # (H, D) block-diag ones

    # Q projection: one (tm, D) x (D, D) MXU matmul.
    q = jnp.dot(a, wq, preferred_element_type=jnp.float32) + bq       # (tm, D)

    # Per-neighbor fused K|V projection + per-head scaled scores.
    # k is small and static, so this Python loop fully unrolls.
    s_list = []
    v_list = []
    for j in range(k):
        nj = neighbor_ref[j]                                            # (tm, D)
        kv = jnp.dot(nj, wkv, preferred_element_type=jnp.float32) + bkv  # (tm, 2D)
        kj = kv[:, :D]
        v_list.append(kv[:, D:])
        # Full-width VPU product, then block-diagonal MXU reduction down to H
        # per-head scores (the 1/sqrt(Dh) scale is folded into mh).  This
        # keeps the XLU free of tiny 8-lane reductions.
        s_list.append(jnp.dot(q * kj, mh,
                              preferred_element_type=jnp.float32))      # (tm, H)

    # Numerically-stable softmax over the k neighbors (per row, per head).
    m = s_list[0]
    for j in range(1, k):
        m = jnp.maximum(m, s_list[j])
    e_list = [jnp.exp(s - m) for s in s_list]
    denom = e_list[0]
    for j in range(1, k):
        denom = denom + e_list[j]
    # Exact reciprocal keeps parity with the f32 reference;
    # pl.reciprocal(denom, approx=True) would move this onto the EUP slot.
    inv = pl.reciprocal(denom)                                           # (tm, H)

    # Weighted sum of V: expand per-head weights to full D lanes on the MXU and
    # accumulate with dense (tm, D) VPU FMAs (no per-head slicing / concat).
    w0 = jnp.dot(e_list[0] * inv, eh, preferred_element_type=jnp.float32)
    acc = w0 * v_list[0]
    for j in range(1, k):
        wj = jnp.dot(e_list[j] * inv, eh, preferred_element_type=jnp.float32)
        acc = acc + wj * v_list[j]

    out = jnp.dot(acc, wo, preferred_element_type=jnp.float32) + bo
    out_ref[...] = out.astype(out_ref.dtype)


def _pick_tile(N, cap=512):
    """Largest sublane-aligned divisor of N that is <= cap (else take all of N).

    cap=512 keeps blocks far below VMEM limits on v5e/v6e/v7x while leaving a
    parallel grid axis for megacore / dual-TC sharding when N is large.
    """
    for t in range(min(cap, N), 7, -1):
        if N % t == 0 and t % 8 == 0:
            return t
    return N


def cross_attention(anchor, neighbor, params, num_heads, *, tm=None):
    """anchor: (B, V, D), neighbor: (B, V, k, D) -> (B, V, D)."""
    B, V, D = anchor.shape
    k = neighbor.shape[2]
    H = num_heads
    Dh = D // H
    assert Dh * H == D, "dim must be divisible by num_heads"
    N = B * V

    if tm is None:
        tm = _pick_tile(N)
    assert N % tm == 0, "B*V must be divisible by the row tile"

    wq, bq, wk, bk, wv, bv, wo, bo = params

    a2 = anchor.reshape(N, D)
    # Neighbor-major layout (k, N, D): the kernel reads dense (tm, D) slabs per
    # neighbor index.  The transpose happens once in XLA, outside the kernel.
    n3 = jnp.transpose(neighbor.reshape(N, k, D), (1, 0, 2))

    # Fused K|V projection weights / biases.
    wkv = jnp.concatenate([wk, wv], axis=1)          # (D, 2D)
    bkv = jnp.concatenate([bk, bv], axis=1)          # (1, 2D)

    # Block-diagonal head-reduction (D, H) and head-expansion (H, D) matrices;
    # the attention scale is folded into the reduction matrix.
    lane_head = jnp.arange(D) // Dh
    head_ids = jnp.arange(H)
    mh = (lane_head[:, None] == head_ids[None, :]).astype(jnp.float32) / (Dh ** 0.5)
    eh = (head_ids[:, None] == lane_head[None, :]).astype(jnp.float32)

    full = lambda i: (0, 0)
    out = pl.pallas_call(
        _cross_attention_kernel,
        out_shape=jax.ShapeDtypeStruct((N, D), anchor.dtype),
        grid_spec=pltpu.PrefetchScalarGridSpec(
            num_scalar_prefetch=0,
            grid=(N // tm,),
            in_specs=[
                pl.BlockSpec((tm, D), lambda i: (i, 0)),         # anchor rows
                pl.BlockSpec((k, tm, D), lambda i: (0, i, 0)),   # neighbor slabs
                pl.BlockSpec((D, D), full), pl.BlockSpec((1, D), full),          # Wq, bq
                pl.BlockSpec((D, 2 * D), full), pl.BlockSpec((1, 2 * D), full),  # Wkv, bkv
                pl.BlockSpec((D, D), full), pl.BlockSpec((1, D), full),          # Wo, bo
                pl.BlockSpec((D, H), full), pl.BlockSpec((H, D), full),          # mh, eh
            ],
            out_specs=pl.BlockSpec((tm, D), lambda i: (i, 0)),
        ),
        compiler_params=pltpu.CompilerParams(
            dimension_semantics=("parallel",)),
    )(a2, n3, wq, bq, wkv, bkv, wo, bo, mh, eh)

    return out.reshape(B, V, D)


def cross_attention_reference(anchor, neighbor, params, num_heads):
    """Pure-JAX mirror of the PyTorch forward pass, for verification."""
    B, V, D = anchor.shape
    k = neighbor.shape[2]
    H = num_heads
    Dh = D // H
    wq, bq, wk, bk, wv, bv, wo, bo = params

    Q = anchor @ wq + bq                                           # (B,V,D)
    K = neighbor @ wk + bk                                         # (B,V,k,D)
    Vv = neighbor @ wv + bv

    Q = Q.reshape(B, V, H, Dh).transpose(0, 2, 1, 3)               # (B,H,V,Dh)
    K = K.reshape(B, V, k, H, Dh).transpose(0, 3, 1, 2, 4)         # (B,H,V,k,Dh)
    Vv = Vv.reshape(B, V, k, H, Dh).transpose(0, 3, 1, 2, 4)

    s = (Q[:, :, :, None, :] * K).sum(-1) / (Dh ** 0.5)            # (B,H,V,k)
    w = jax.nn.softmax(s, axis=-1)
    o = (w[..., None] * Vv).sum(3)                                 # (B,H,V,Dh)
    o = o.transpose(0, 2, 1, 3).reshape(B, V, D)
    return o @ wo + bo


if __name__ == "__main__":
    B, V, k, D, H = 2, 8, 4, 32, 4   # dim=32, num_heads=4, head_dim=8

    key = jax.random.PRNGKey(0)
    keys = jax.random.split(key, 12)

    anchor = jax.random.normal(keys[0], (B, V, D), jnp.float32)
    neighbor = jax.random.normal(keys[1], (B, V, k, D), jnp.float32)

    def init_linear(kw, kb):
        # Deterministic synthetic init (PyTorch-Linear-like scale), stored as
        # (in, out) so the projection is x @ w + b.
        bound = 1.0 / (D ** 0.5)
        w = jax.random.uniform(kw, (D, D), jnp.float32, -bound, bound)
        b = jax.random.uniform(kb, (1, D), jnp.float32, -bound, bound)
        return w, b

    wq, bq = init_linear(keys[2], keys[3])
    wk, bk = init_linear(keys[4], keys[5])
    wv, bv = init_linear(keys[6], keys[7])
    wo, bo = init_linear(keys[8], keys[9])
    params = (wq, bq, wk, bk, wv, bv, wo, bo)

    out = cross_attention(anchor, neighbor, params, H)
    jax.block_until_ready(out)

    ref = cross_attention_reference(anchor, neighbor, params, H)
    err = float(jnp.max(jnp.abs(out - ref)))
    assert out.shape == (B, V, D), out.shape
    assert err < 2e-3, f"max abs error {err}"

    print("KERNEL_OK")
</pallas_src>

<mosaic_0001>
module attributes {stable_mosaic.version = 11 : i64} {
  func.func @_cross_attention_kernel(%arg0: i32, %arg1: memref<16x32xf32, #tpu.memory_space<vmem>>, %arg2: memref<4x16x32xf32, #tpu.memory_space<vmem>>, %arg3: memref<32x32xf32, #tpu.memory_space<vmem>>, %arg4: memref<1x32xf32, #tpu.memory_space<vmem>>, %arg5: memref<32x64xf32, #tpu.memory_space<vmem>>, %arg6: memref<1x64xf32, #tpu.memory_space<vmem>>, %arg7: memref<32x32xf32, #tpu.memory_space<vmem>>, %arg8: memref<1x32xf32, #tpu.memory_space<vmem>>, %arg9: memref<32x4xf32, #tpu.memory_space<vmem>>, %arg10: memref<4x32xf32, #tpu.memory_space<vmem>>, %arg11: memref<16x32xf32, #tpu.memory_space<vmem>>) attributes {dimension_semantics = [#tpu.dimension_semantics<parallel>], iteration_bounds = array<i64: 1>, scalar_prefetch = 0 : i64, scratch_operands = 0 : i64, tpu.core_type = #tpu.core_type<tc>, window_params = [{transform_indices = @transform_0, window_bounds = array<i64: 16, 32>}, {transform_indices = @transform_1, window_bounds = array<i64: 4, 16, 32>}, {pipeline_mode = #tpu.pipeline_mode<synchronous>, transform_indices = @transform_2, window_bounds = array<i64: 32, 32>}, {pipeline_mode = #tpu.pipeline_mode<synchronous>, transform_indices = @transform_3, window_bounds = array<i64: 1, 32>}, {pipeline_mode = #tpu.pipeline_mode<synchronous>, transform_indices = @transform_4, window_bounds = array<i64: 32, 64>}, {pipeline_mode = #tpu.pipeline_mode<synchronous>, transform_indices = @transform_5, window_bounds = array<i64: 1, 64>}, {pipeline_mode = #tpu.pipeline_mode<synchronous>, transform_indices = @transform_6, window_bounds = array<i64: 32, 32>}, {pipeline_mode = #tpu.pipeline_mode<synchronous>, transform_indices = @transform_7, window_bounds = array<i64: 1, 32>}, {pipeline_mode = #tpu.pipeline_mode<synchronous>, transform_indices = @transform_8, window_bounds = array<i64: 32, 4>}, {pipeline_mode = #tpu.pipeline_mode<synchronous>, transform_indices = @transform_9, window_bounds = array<i64: 4, 32>}, {transform_indices = @transform_10, window_bounds = array<i64: 16, 32>}]} {
    %c0 = arith.constant 0 : index
    %c0_0 = arith.constant 0 : index
    %0 = vector.load %arg1[%c0, %c0_0] : memref<16x32xf32, #tpu.memory_space<vmem>>, vector<16x32xf32>
    %c0_1 = arith.constant 0 : index
    %c0_2 = arith.constant 0 : index
    %1 = vector.load %arg3[%c0_1, %c0_2] : memref<32x32xf32, #tpu.memory_space<vmem>>, vector<32x32xf32>
    %c0_3 = arith.constant 0 : index
    %c0_4 = arith.constant 0 : index
    %2 = vector.load %arg4[%c0_3, %c0_4] : memref<1x32xf32, #tpu.memory_space<vmem>>, vector<1x32xf32>
    %c0_5 = arith.constant 0 : index
    %c0_6 = arith.constant 0 : index
    %3 = vector.load %arg5[%c0_5, %c0_6] : memref<32x64xf32, #tpu.memory_space<vmem>>, vector<32x64xf32>
    %c0_7 = arith.constant 0 : index
    %c0_8 = arith.constant 0 : index
    %4 = vector.load %arg6[%c0_7, %c0_8] : memref<1x64xf32, #tpu.memory_space<vmem>>, vector<1x64xf32>
    %c0_9 = arith.constant 0 : index
    %c0_10 = arith.constant 0 : index
    %5 = vector.load %arg7[%c0_9, %c0_10] : memref<32x32xf32, #tpu.memory_space<vmem>>, vector<32x32xf32>
    %c0_11 = arith.constant 0 : index
    %c0_12 = arith.constant 0 : index
    %6 = vector.load %arg8[%c0_11, %c0_12] : memref<1x32xf32, #tpu.memory_space<vmem>>, vector<1x32xf32>
    %c0_13 = arith.constant 0 : index
    %c0_14 = arith.constant 0 : index
    %7 = vector.load %arg9[%c0_13, %c0_14] : memref<32x4xf32, #tpu.memory_space<vmem>>, vector<32x4xf32>
    %c0_15 = arith.constant 0 : index
    %c0_16 = arith.constant 0 : index
    %8 = vector.load %arg10[%c0_15, %c0_16] : memref<4x32xf32, #tpu.memory_space<vmem>>, vector<4x32xf32>
    %cst = arith.constant dense<0.000000e+00> : vector<16x32xf32>
    %9 = tpu.matmul %0, %1, %cst {dimension_numbers = #tpu.dot_dimension_numbers<[1], [0], [0], [1], [0, 0, 1, 1], [], []>} : vector<16x32xf32>, vector<32x32xf32>, vector<16x32xf32> -> vector<16x32xf32>
    %10 = vector.broadcast %2 : vector<1x32xf32> to vector<16x32xf32>
    %11 = arith.addf %9, %10 : vector<16x32xf32>
    %c0_17 = arith.constant 0 : index
    %c0_18 = arith.constant 0 : index
    %c0_19 = arith.constant 0 : index
    %12 = vector.load %arg2[%c0_17, %c0_18, %c0_19] : memref<4x16x32xf32, #tpu.memory_space<vmem>>, vector<1x16x32xf32>
    %13 = vector.shape_cast %12 : vector<1x16x32xf32> to vector<16x32xf32>
    %cst_20 = arith.constant dense<0.000000e+00> : vector<16x64xf32>
    %14 = tpu.matmul %13, %3, %cst_20 {dimension_numbers = #tpu.dot_dimension_numbers<[1], [0], [0], [1], [0, 0, 1, 1], [], []>} : vector<16x32xf32>, vector<32x64xf32>, vector<16x64xf32> -> vector<16x64xf32>
    %15 = vector.broadcast %4 : vector<1x64xf32> to vector<16x64xf32>
    %16 = arith.addf %14, %15 : vector<16x64xf32>
    %17 = vector.extract_strided_slice %16 {offsets = [0, 0], sizes = [16, 32], strides = [1, 1]} : vector<16x64xf32> to vector<16x32xf32>
    %18 = vector.extract_strided_slice %16 {offsets = [0, 32], sizes = [16, 32], strides = [1, 1]} : vector<16x64xf32> to vector<16x32xf32>
    %19 = arith.mulf %11, %17 : vector<16x32xf32>
    %cst_21 = arith.constant dense<0.000000e+00> : vector<16x4xf32>
    %20 = tpu.matmul %19, %7, %cst_21 {dimension_numbers = #tpu.dot_dimension_numbers<[1], [0], [0], [1], [0, 0, 1, 1], [], []>} : vector<16x32xf32>, vector<32x4xf32>, vector<16x4xf32> -> vector<16x4xf32>
    %c1 = arith.constant 1 : index
    %c0_22 = arith.constant 0 : index
    %c0_23 = arith.constant 0 : index
    %21 = vector.load %arg2[%c1, %c0_22, %c0_23] : memref<4x16x32xf32, #tpu.memory_space<vmem>>, vector<1x16x32xf32>
    %22 = vector.shape_cast %21 : vector<1x16x32xf32> to vector<16x32xf32>
    %cst_24 = arith.constant dense<0.000000e+00> : vector<16x64xf32>
    %23 = tpu.matmul %22, %3, %cst_24 {dimension_numbers = #tpu.dot_dimension_numbers<[1], [0], [0], [1], [0, 0, 1, 1], [], []>} : vector<16x32xf32>, vector<32x64xf32>, vector<16x64xf32> -> vector<16x64xf32>
    %24 = vector.broadcast %4 : vector<1x64xf32> to vector<16x64xf32>
    %25 = arith.addf %23, %24 : vector<16x64xf32>
    %26 = vector.extract_strided_slice %25 {offsets = [0, 0], sizes = [16, 32], strides = [1, 1]} : vector<16x64xf32> to vector<16x32xf32>
    %27 = vector.extract_strided_slice %25 {offsets = [0, 32], sizes = [16, 32], strides = [1, 1]} : vector<16x64xf32> to vector<16x32xf32>
    %28 = arith.mulf %11, %26 : vector<16x32xf32>
    %cst_25 = arith.constant dense<0.000000e+00> : vector<16x4xf32>
    %29 = tpu.matmul %28, %7, %cst_25 {dimension_numbers = #tpu.dot_dimension_numbers<[1], [0], [0], [1], [0, 0, 1, 1], [], []>} : vector<16x32xf32>, vector<32x4xf32>, vector<16x4xf32> -> vector<16x4xf32>
    %c2 = arith.constant 2 : index
    %c0_26 = arith.constant 0 : index
    %c0_27 = arith.constant 0 : index
    %30 = vector.load %arg2[%c2, %c0_26, %c0_27] : memref<4x16x32xf32, #tpu.memory_space<vmem>>, vector<1x16x32xf32>
    %31 = vector.shape_cast %30 : vector<1x16x32xf32> to vector<16x32xf32>
    %cst_28 = arith.constant dense<0.000000e+00> : vector<16x64xf32>
    %32 = tpu.matmul %31, %3, %cst_28 {dimension_numbers = #tpu.dot_dimension_numbers<[1], [0], [0], [1], [0, 0, 1, 1], [], []>} : vector<16x32xf32>, vector<32x64xf32>, vector<16x64xf32> -> vector<16x64xf32>
    %33 = vector.broadcast %4 : vector<1x64xf32> to vector<16x64xf32>
    %34 = arith.addf %32, %33 : vector<16x64xf32>
    %35 = vector.extract_strided_slice %34 {offsets = [0, 0], sizes = [16, 32], strides = [1, 1]} : vector<16x64xf32> to vector<16x32xf32>
    %36 = vector.extract_strided_slice %34 {offsets = [0, 32], sizes = [16, 32], strides = [1, 1]} : vector<16x64xf32> to vector<16x32xf32>
    %37 = arith.mulf %11, %35 : vector<16x32xf32>
    %cst_29 = arith.constant dense<0.000000e+00> : vector<16x4xf32>
    %38 = tpu.matmul %37, %7, %cst_29 {dimension_numbers = #tpu.dot_dimension_numbers<[1], [0], [0], [1], [0, 0, 1, 1], [], []>} : vector<16x32xf32>, vector<32x4xf32>, vector<16x4xf32> -> vector<16x4xf32>
    %c3 = arith.constant 3 : index
    %c0_30 = arith.constant 0 : index
    %c0_31 = arith.constant 0 : index
    %39 = vector.load %arg2[%c3, %c0_30, %c0_31] : memref<4x16x32xf32, #tpu.memory_space<vmem>>, vector<1x16x32xf32>
    %40 = vector.shape_cast %39 : vector<1x16x32xf32> to vector<16x32xf32>
    %cst_32 = arith.constant dense<0.000000e+00> : vector<16x64xf32>
    %41 = tpu.matmul %40, %3, %cst_32 {dimension_numbers = #tpu.dot_dimension_numbers<[1], [0], [0], [1], [0, 0, 1, 1], [], []>} : vector<16x32xf32>, vector<32x64xf32>, vector<16x64xf32> -> vector<16x64xf32>
    %42 = vector.broadcast %4 : vector<1x64xf32> to vector<16x64xf32>
    %43 = arith.addf %41, %42 : vector<16x64xf32>
    %44 = vector.extract_strided_slice %43 {offsets = [0, 0], sizes = [16, 32], strides = [1, 1]} : vector<16x64xf32> to vector<16x32xf32>
    %45 = vector.extract_strided_slice %43 {offsets = [0, 32], sizes = [16, 32], strides = [1, 1]} : vector<16x64xf32> to vector<16x32xf32>
    %46 = arith.mulf %11, %44 : vector<16x32xf32>
    %cst_33 = arith.constant dense<0.000000e+00> : vector<16x4xf32>
    %47 = tpu.matmul %46, %7, %cst_33 {dimension_numbers = #tpu.dot_dimension_numbers<[1], [0], [0], [1], [0, 0, 1, 1], [], []>} : vector<16x32xf32>, vector<32x4xf32>, vector<16x4xf32> -> vector<16x4xf32>
    %48 = arith.maximumf %20, %29 : vector<16x4xf32>
    %49 = arith.maximumf %48, %38 : vector<16x4xf32>
    %50 = arith.maximumf %49, %47 : vector<16x4xf32>
    %51 = arith.subf %20, %50 : vector<16x4xf32>
    %52 = math.exp %51 : vector<16x4xf32>
    %53 = arith.subf %29, %50 : vector<16x4xf32>
    %54 = math.exp %53 : vector<16x4xf32>
    %55 = arith.subf %38, %50 : vector<16x4xf32>
    %56 = math.exp %55 : vector<16x4xf32>
    %57 = arith.subf %47, %50 : vector<16x4xf32>
    %58 = math.exp %57 : vector<16x4xf32>
    %59 = arith.addf %52, %54 : vector<16x4xf32>
    %60 = arith.addf %59, %56 : vector<16x4xf32>
    %61 = arith.addf %60, %58 : vector<16x4xf32>
    %62 = tpu.reciprocal %61 : vector<16x4xf32> -> vector<16x4xf32>
    %63 = arith.mulf %52, %62 : vector<16x4xf32>
    %cst_34 = arith.constant dense<0.000000e+00> : vector<16x32xf32>
    %64 = tpu.matmul %63, %8, %cst_34 {dimension_numbers = #tpu.dot_dimension_numbers<[1], [0], [0], [1], [0, 0, 1, 1], [], []>} : vector<16x4xf32>, vector<4x32xf32>, vector<16x32xf32> -> vector<16x32xf32>
    %65 = arith.mulf %64, %18 : vector<16x32xf32>
    %66 = arith.mulf %54, %62 : vector<16x4xf32>
    %cst_35 = arith.constant dense<0.000000e+00> : vector<16x32xf32>
    %67 = tpu.matmul %66, %8, %cst_35 {dimension_numbers = #tpu.dot_dimension_numbers<[1], [0], [0], [1], [0, 0, 1, 1], [], []>} : vector<16x4xf32>, vector<4x32xf32>, vector<16x32xf32> -> vector<16x32xf32>
    %68 = arith.mulf %67, %27 : vector<16x32xf32>
    %69 = arith.addf %65, %68 : vector<16x32xf32>
    %70 = arith.mulf %56, %62 : vector<16x4xf32>
    %cst_36 = arith.constant dense<0.000000e+00> : vector<16x32xf32>
    %71 = tpu.matmul %70, %8, %cst_36 {dimension_numbers = #tpu.dot_dimension_numbers<[1], [0], [0], [1], [0, 0, 1, 1], [], []>} : vector<16x4xf32>, vector<4x32xf32>, vector<16x32xf32> -> vector<16x32xf32>
    %72 = arith.mulf %71, %36 : vector<16x32xf32>
    %73 = arith.addf %69, %72 : vector<16x32xf32>
    %74 = arith.mulf %58, %62 : vector<16x4xf32>
    %cst_37 = arith.constant dense<0.000000e+00> : vector<16x32xf32>
    %75 = tpu.matmul %74, %8, %cst_37 {dimension_numbers = #tpu.dot_dimension_numbers<[1], [0], [0], [1], [0, 0, 1, 1], [], []>} : vector<16x4xf32>, vector<4x32xf32>, vector<16x32xf32> -> vector<16x32xf32>
    %76 = arith.mulf %75, %45 : vector<16x32xf32>
    %77 = arith.addf %73, %76 : vector<16x32xf32>
    %cst_38 = arith.constant dense<0.000000e+00> : vector<16x32xf32>
    %78 = tpu.matmul %77, %5, %cst_38 {dimension_numbers = #tpu.dot_dimension_numbers<[1], [0], [0], [1], [0, 0, 1, 1], [], []>} : vector<16x32xf32>, vector<32x32xf32>, vector<16x32xf32> -> vector<16x32xf32>
    %79 = vector.broadcast %6 : vector<1x32xf32> to vector<16x32xf32>
    %80 = arith.addf %78, %79 : vector<16x32xf32>
    %c0_39 = arith.constant 0 : index
    %c0_40 = arith.constant 0 : index
    %81 = vector.load %arg11[%c0_39, %c0_40] : memref<16x32xf32, #tpu.memory_space<vmem>>, vector<16x32xf32>
    tpu.vector_store %arg11[%c0_39, %c0_40], %80 {strides = array<i32>} : memref<16x32xf32, #tpu.memory_space<vmem>>, vector<16x32xf32>,
    return
  }
  func.func @transform_0(%arg0: i32) -> (i32, i32) {
    %c0_i32 = arith.constant 0 : i32
    %c0_i32_0 = arith.constant 0 : i32
    return %arg0, %c0_i32 : i32, i32
  }
  func.func @transform_1(%arg0: i32) -> (i32, i32, i32) {
    %c0_i32 = arith.constant 0 : i32
    %c0_i32_0 = arith.constant 0 : i32
    %c0_i32_1 = arith.constant 0 : i32
    return %c0_i32, %arg0, %c0_i32_0 : i32, i32, i32
  }
  func.func @transform_2(%arg0: i32) -> (i32, i32) {
    %c0_i32 = arith.constant 0 : i32
    %c0_i32_0 = arith.constant 0 : i32
    %c0_i32_1 = arith.constant 0 : i32
    return %c0_i32, %c0_i32_0 : i32, i32
  }
  func.func @transform_3(%arg0: i32) -> (i32, i32) {
    %c0_i32 = arith.constant 0 : i32
    %c0_i32_0 = arith.constant 0 : i32
    %c0_i32_1 = arith.constant 0 : i32
    return %c0_i32, %c0_i32_0 : i32, i32
  }
  func.func @transform_4(%arg0: i32) -> (i32, i32) {
    %c0_i32 = arith.constant 0 : i32
    %c0_i32_0 = arith.constant 0 : i32
    %c0_i32_1 = arith.constant 0 : i32
    return %c0_i32, %c0_i32_0 : i32, i32
  }
  func.func @transform_5(%arg0: i32) -> (i32, i32) {
    %c0_i32 = arith.constant 0 : i32
    %c0_i32_0 = arith.constant 0 : i32
    %c0_i32_1 = arith.constant 0 : i32
    return %c0_i32, %c0_i32_0 : i32, i32
  }
  func.func @transform_6(%arg0: i32) -> (i32, i32) {
    %c0_i32 = arith.constant 0 : i32
    %c0_i32_0 = arith.constant 0 : i32
    %c0_i32_1 = arith.constant 0 : i32
    return %c0_i32, %c0_i32_0 : i32, i32
  }
  func.func @transform_7(%arg0: i32) -> (i32, i32) {
    %c0_i32 = arith.constant 0 : i32
    %c0_i32_0 = arith.constant 0 : i32
    %c0_i32_1 = arith.constant 0 : i32
    return %c0_i32, %c0_i32_0 : i32, i32
  }
  func.func @transform_8(%arg0: i32) -> (i32, i32) {
    %c0_i32 = arith.constant 0 : i32
    %c0_i32_0 = arith.constant 0 : i32
    %c0_i32_1 = arith.constant 0 : i32
    return %c0_i32, %c0_i32_0 : i32, i32
  }
  func.func @transform_9(%arg0: i32) -> (i32, i32) {
    %c0_i32 = arith.constant 0 : i32
    %c0_i32_0 = arith.constant 0 : i32
    %c0_i32_1 = arith.constant 0 : i32
    return %c0_i32, %c0_i32_0 : i32, i32
  }
  func.func @transform_10(%arg0: i32) -> (i32, i32) {
    %c0_i32 = arith.constant 0 : i32
    %c0_i32_0 = arith.constant 0 : i32
    return %arg0, %c0_i32 : i32, i32
  }
}

</mosaic_0001>

<llo_original>
// kernel: tpu_custom_call.1
$region0: #{tpu_custom_call.1}
  #allocation0 [shape = 'u32[]', space=smem, size = 0x4, offset = 0x4, fixed_abs, tag = 'smem constant byte address 0x4 - core index']
  #allocation1 [shape = 'u32[144,128]{1,0:T(1,128)}', space=vmem, size = 0x12000, scoped, tag = 'internal scratch']
  %s0 = inlined_call_operand.hbm [shape: f32[16,32], index: 0, kind: input, shape index: {}]
  %s1 = inlined_call_operand.hbm [shape: f32[4,16,32], index: 1, kind: input, shape index: {}]
  %s2 = inlined_call_operand.vmem [shape: f32[32,32], index: 2, kind: input, shape index: {}]
  %s3 = inlined_call_operand.vmem [shape: f32[1,32], index: 3, kind: input, shape index: {}]
  %s4 = inlined_call_operand.hbm [shape: f32[32,64], index: 4, kind: input, shape index: {}]
  %s5 = inlined_call_operand.vmem [shape: f32[1,64], index: 5, kind: input, shape index: {}]
  %s6 = inlined_call_operand.hbm [shape: f32[32,32], index: 6, kind: input, shape index: {}]
  %s7 = inlined_call_operand.vmem [shape: f32[1,32], index: 7, kind: input, shape index: {}]
  %s8 = inlined_call_operand.vmem [shape: f32[32,4], index: 8, kind: input, shape index: {}]
  %s9 = inlined_call_operand.vmem [shape: f32[4,32], index: 9, kind: input, shape index: {}]
  %s10 = inlined_call_operand.hbm [shape: f32[16,32], index: 10, kind: output, shape index: {}]
  %s11 = sld [smem:[#allocation0]]
  $region66: #{tpu_custom_call.1} parent=0
    _
  %s13 = ssub.s32 1, %s11
  %s14 = scalar_select 0, %s13, %s11
  $region1: #{tpu_custom_call.1} parent=0
    #allocation2 [shape = 'u8[8192]{0}', space=vmem, size = 0x2000, scoped, tag = 'input window, operand 0, single buffered']
    #allocation3 [shape = 's32[1]{0}', space=sflag, size = 0x4, scoped, tag = 'scoped memory for tpu_custom_call.1']
    #allocation4 [shape = 's32[1]{0}', space=sflag, size = 0x4, scoped, tag = 'scoped memory for tpu_custom_call.1']
    #allocation5 [shape = 'u8[32768]{0}', space=vmem, size = 0x8000, scoped, tag = 'input window, operand 1, single buffered']
    #allocation6 [shape = 's32[1]{0}', space=sflag, size = 0x4, scoped, tag = 'scoped memory for tpu_custom_call.1']
    #allocation7 [shape = 'u8[16384]{0}', space=vmem, size = 0x4000, scoped, tag = 'input window, operand 4, single buffered']
    #allocation8 [shape = 'u8[16384]{0}', space=vmem, size = 0x4000, scoped, tag = 'input window, operand 6, single buffered']
    #allocation9 [shape = 's32[1]{0}', space=sflag, size = 0x4, scoped, tag = 'scoped memory for tpu_custom_call.1']
    #allocation10 [shape = 'u8[8192]{0}', space=vmem, size = 0x2000, scoped, tag = 'output window, operand 0, single buffered']
    %15 = vsyncpa [#allocation3], 0
    %16 = vsyncpa [#allocation6], 0
    %17 = vsyncpa [#allocation9], 0
    %18 = vsyncpa [#allocation4], 0
    // Predicated region
    $region2: #{tpu_custom_call.1} parent=1 // pred_check
      _
    $region3: #{tpu_custom_call.1} parent=1 // pred_check_branch
      %20 = sbr.rel (0) target = $region5
    $region4: #{tpu_custom_call.1} parent=1 // pred_region
      %s22 = ssub.s32 256, 256
      %23 = vsyncadd [#allocation3], %s22
      %s24 = sshll.u32 [#allocation2], 4
      %s25 = int_to_ptr.vmem [resolvable:$true] %s24
      %30 = dma.hbm_to_vmem [thread:$0]  %s0, 256, %s25, [#allocation3], 128, 128, 8
    $region5: #{tpu_custom_call.1} parent=1 // pred_fallthru
      _
    // Predicated region
    $region6: #{tpu_custom_call.1} parent=1 // pred_check
      _
    $region7: #{tpu_custom_call.1} parent=1 // pred_check_branch
      %32 = sbr.rel (0) target = $region9
    $region8: #{tpu_custom_call.1} parent=1 // pred_region
      %s34 = ssub.s32 1024, 1024
      %35 = vsyncadd [#allocation6], %s34
      %s36 = sshll.u32 [#allocation5], 4
      %s37 = int_to_ptr.vmem [resolvable:$true] %s36
      %42 = dma.hbm_to_vmem [thread:$0]  %s1, 1024, %s37, [#allocation6], 128, 128, 8
    $region9: #{tpu_custom_call.1} parent=1 // pred_fallthru
      _
    // Predicated region
    $region10: #{tpu_custom_call.1} parent=1 // pred_check
      _
    $region11: #{tpu_custom_call.1} parent=1 // pred_check_branch
      %44 = sbr.rel (0) target = $region13
    $region12: #{tpu_custom_call.1} parent=1 // pred_region
      _
    $region13: #{tpu_custom_call.1} parent=1 // pred_fallthru
      _
    // Predicated region
    $region14: #{tpu_custom_call.1} parent=1 // pred_check
      _
    $region15: #{tpu_custom_call.1} parent=1 // pred_check_branch
      %46 = sbr.rel (0) target = $region17
    $region16: #{tpu_custom_call.1} parent=1 // pred_region
      _
    $region17: #{tpu_custom_call.1} parent=1 // pred_fallthru
      _
    // Predicated region
    $region18: #{tpu_custom_call.1} parent=1 // pred_check
      _
    $region19: #{tpu_custom_call.1} parent=1 // pred_check_branch
      %48 = sbr.rel (0) target = $region21
    $region20: #{tpu_custom_call.1} parent=1 // pred_region
      %s50 = ssub.s32 512, 512
      %51 = vsyncadd [#allocation6], %s50
      %s52 = sshll.u32 [#allocation7], 4
      %s53 = int_to_ptr.vmem [resolvable:$true] %s52
      %58 = dma.hbm_to_vmem [thread:$0]  %s4, 512, %s53, [#allocation6], 128, 128, 8
    $region21: #{tpu_custom_call.1} parent=1 // pred_fallthru
      _
    // Predicated region
    $region22: #{tpu_custom_call.1} parent=1 // pred_check
      _
    $region23: #{tpu_custom_call.1} parent=1 // pred_check_branch
      %60 = sbr.rel (0) target = $region25
    $region24: #{tpu_custom_call.1} parent=1 // pred_region
      _
    $region25: #{tpu_custom_call.1} parent=1 // pred_fallthru
      _
    // Predicated region
    $region26: #{tpu_custom_call.1} parent=1 // pred_check
      _
    $region27: #{tpu_custom_call.1} parent=1 // pred_check_branch
      %62 = sbr.rel (0) target = $region29
    $region28: #{tpu_custom_call.1} parent=1 // pred_region
      %s64 = ssub.s32 512, 512
      %65 = vsyncadd [#allocation9], %s64
      %s66 = sshll.u32 [#allocation8], 4
      %s67 = int_to_ptr.vmem [resolvable:$true] %s66
      %72 = dma.hbm_to_vmem [thread:$0]  %s6, 512, %s67, [#allocation9], 128, 128, 8
    $region29: #{tpu_custom_call.1} parent=1 // pred_fallthru
      _
    // Predicated region
    $region30: #{tpu_custom_call.1} parent=1 // pred_check
      _
    $region31: #{tpu_custom_call.1} parent=1 // pred_check_branch
      %74 = sbr.rel (0) target = $region33
    $region32: #{tpu_custom_call.1} parent=1 // pred_region
      _
    $region33: #{tpu_custom_call.1} parent=1 // pred_fallthru
      _
    // Predicated region
    $region34: #{tpu_custom_call.1} parent=1 // pred_check
      _
    $region35: #{tpu_custom_call.1} parent=1 // pred_check_branch
      %76 = sbr.rel (0) target = $region37
    $region36: #{tpu_custom_call.1} parent=1 // pred_region
      _
    $region37: #{tpu_custom_call.1} parent=1 // pred_fallthru
      _
    // Predicated region
    $region38: #{tpu_custom_call.1} parent=1 // pred_check
      _
    $region39: #{tpu_custom_call.1} parent=1 // pred_check_branch
      %78 = sbr.rel (0) target = $region41
    $region40: #{tpu_custom_call.1} parent=1 // pred_region
      _
    $region41: #{tpu_custom_call.1} parent=1 // pred_fallthru
      _
    // Predicated region
    $region42: #{tpu_custom_call.1} parent=1 // pred_check
      _
    $region43: #{tpu_custom_call.1} parent=1 // pred_check_branch
      %80 = sbr.rel (0) target = $region45
    $region44: #{tpu_custom_call.1} parent=1 // pred_region
      %81 = dma.done [#allocation3], 256
    $region45: #{tpu_custom_call.1} parent=1 // pred_fallthru
      _
    // Predicated region
    $region46: #{tpu_custom_call.1} parent=1 // pred_check
      _
    $region47: #{tpu_custom_call.1} parent=1 // pred_check_branch
      %83 = sbr.rel (0) target = $region49
    $region48: #{tpu_custom_call.1} parent=1 // pred_region
      %84 = dma.done [#allocation6], 1024
    $region49: #{tpu_custom_call.1} parent=1 // pred_fallthru
      _
    // Predicated region
    $region50: #{tpu_custom_call.1} parent=1 // pred_check
      _
    $region51: #{tpu_custom_call.1} parent=1 // pred_check_branch
      %86 = sbr.rel (0) target = $region53
    $region52: #{tpu_custom_call.1} parent=1 // pred_region
      %87 = dma.done [#allocation6], 512
    $region53: #{tpu_custom_call.1} parent=1 // pred_fallthru
      _
    // Predicated region
    $region54: #{tpu_custom_call.1} parent=1 // pred_check
      _
    $region55: #{tpu_custom_call.1} parent=1 // pred_check_branch
      %89 = sbr.rel (0) target = $region57
    $region56: #{tpu_custom_call.1} parent=1 // pred_region
      %90 = dma.done [#allocation9], 512
    $region57: #{tpu_custom_call.1} parent=1 // pred_fallthru
      _
    %v91 = vld [vmem:[#allocation2] sm:$0xff]
    %v92 = vld [vmem:[#allocation2 + $0x8] sm:$0xff]
    %v93 = vld [vmem:[%s2] sm:$0xff]
    %v94 = vld [vmem:[%s2 + $0x8] sm:$0xff]
    %v95 = vld [vmem:[%s2 + $0x10] sm:$0xff]
    %v96 = vld [vmem:[%s2 + $0x18] sm:$0xff]
    %v97 = vld [vmem:[%s3] sm:$0x1]
    %v98 = vld [vmem:[#allocation7] sm:$0xff]
    %v99 = vld [vmem:[#allocation7 + $0x8] sm:$0xff]
    %v100 = vld [vmem:[#allocation7 + $0x10] sm:$0xff]
    %v101 = vld [vmem:[#allocation7 + $0x18] sm:$0xff]
    %v102 = vld [vmem:[%s5] sm:$0x1]
    %v103 = vld [vmem:[#allocation8] sm:$0xff]
    %v104 = vld [vmem:[#allocation8 + $0x8] sm:$0xff]
    %v105 = vld [vmem:[#allocation8 + $0x10] sm:$0xff]
    %v106 = vld [vmem:[#allocation8 + $0x18] sm:$0xff]
    %v107 = vld [vmem:[%s7] sm:$0x1]
    %v108 = vld [vmem:[%s8] sm:$0xff]
    %v109 = vld [vmem:[%s8 + $0x8] sm:$0xff]
    %v110 = vld [vmem:[%s8 + $0x10] sm:$0xff]
    %v111 = vld [vmem:[%s8 + $0x18] sm:$0xff]
    %v112 = vld [vmem:[%s9] sm:$0xf]
    %v114 = vlaneseq
    %v115 = vshrl.u32 %v114, 7
    %v116 = vsub.s32 0, %v115
    %v117 = vrot.slane %v97, %v116
    %vm119 = vcmask 261120
    %v121 = vsel %vm119, %v91, 0
    %v124 = vsel %vm119, %v92, 0
    %126 = vmatprep.subr.mxu0 0.0
    %127 = vmatpush1.msra.mxu0 %v93
    %128 = vmatprep.subr.mxu0 0.0
    %129 = vmatpush1.msra.mxu0 %v94
    %130 = vmatprep.subr.mxu0 0.0
    %131 = vmatpush1.msra.mxu0 %v95
    %132 = vmatprep.subr.mxu0 0.0
    %133 = vmatpush1.msra.mxu0 %v96
    %134 = vmatprep.subr.mxu0 0.0
    %135 = vmatpush1.msra.mxu0 0.0
    %136 = vmatprep.subr.mxu0 0.0
    %137 = vmatpush1.msra.mxu0 0.0
    %138 = vmatprep.subr.mxu0 0.0
    %139 = vmatpush1.msra.mxu0 0.0
    %140 = vmatprep.subr.mxu0 0.0
    %141 = vmatpush1.msra.mxu0 0.0
    %142 = vmatprep.subr.mxu0 0.0
    %143 = vmatpush1.msra.mxu0 0.0
    %144 = vmatprep.subr.mxu0 0.0
    %145 = vmatpush1.msra.mxu0 0.0
    %146 = vmatprep.subr.mxu0 0.0
    %147 = vmatpush1.msra.mxu0 0.0
    %148 = vmatprep.subr.mxu0 0.0
    %149 = vmatpush1.msra.mxu0 0.0
    %150 = vmatprep.subr.mxu0 0.0
    %151 = vmatpush1.msra.mxu0 0.0
    %152 = vmatprep.subr.mxu0 0.0
    %153 = vmatpush1.msra.mxu0 0.0
    %154 = vmatprep.subr.mxu0 0.0
    %155 = vmatpush1.msra.mxu0 0.0
    %156 = vmatprep.subr.mxu0 0.0
    %157 = vmatpush1.msra.mxu0 0.0
    %158 = vmatprep.subr.mxu0 0.0
    %159 = vmatpush1.msra.mxu0 0.0
    %160 = vmatprep.subr.mxu0 0.0
    %161 = vmatpush1.msra.mxu0 0.0
    %162 = vmatprep.subr.mxu0 0.0
    %163 = vmatpush1.msra.mxu0 0.0
    %164 = vmatprep.subr.mxu0 0.0
    %165 = vmatpush1.msra.mxu0 0.0
    %166 = vmatprep.subr.mxu0 0.0
    %167 = vmatpush1.msra.mxu0 0.0
    %168 = vmatprep.subr.mxu0 0.0
    %169 = vmatpush1.msra.mxu0 0.0
    %170 = vmatprep.subr.mxu0 0.0
    %171 = vmatpush1.msra.mxu0 0.0
    %172 = vmatprep.subr.mxu0 0.0
    %173 = vmatpush1.msra.mxu0 0.0
    %174 = vmatprep.subr.mxu0 0.0
    %175 = vmatpush1.msra.mxu0 0.0
    %176 = vmatprep.subr.mxu0 0.0
    %177 = vmatpush1.msra.mxu0 0.0
    %178 = vmatprep.subr.mxu0 0.0
    %179 = vmatpush1.msra.mxu0 0.0
    %180 = vmatprep.subr.mxu0 0.0
    %181 = vmatpush1.msra.mxu0 0.0
    %182 = vmatprep.subr.mxu0 0.0
    %183 = vmatpush1.msra.mxu0 0.0
    %184 = vmatprep.subr.mxu0 0.0
    %185 = vmatpush1.msra.mxu0 0.0
    %186 = vmatprep.subr.mxu0 0.0
    %187 = vmatpush1.msra.mxu0 0.0
    %188 = vmatprep.subr.mxu0 0.0
    %189 = vmatpush1.msra.mxu0 0.0
    %190 = vmatprep.mubr.f32.mxu0 0.0
    %191 = vmatmul.mubr.f32.gmra.mrb[0].mxu0 %v121
    %v192 = vpop.f32.mrb[0].mxu0
    %v193 = vadd.f32 %v117, %v192
    %v194 = vpop.f32.mrb[0].mxu0
    %195 = vmatprep.mubr.f32.mxu0 0.0
    %196 = vmatmul.mubr.f32.gmra.mrb[0].mxu0 %v124
    %v197 = vpop.f32.mrb[0].mxu0
    %v198 = vadd.f32 %v117, %v197
    %v199 = vpop.f32.mrb[0].mxu0
    %200 = vdwg.mxu0
    %v201 = vld [vmem:[#allocation5] sm:$0xff]
    %v202 = vld [vmem:[#allocation5 + $0x8] sm:$0xff]
    %v204 = vlaneseq
    %v205 = vshrl.u32 %v204, 7
    %v206 = vsub.s32 0, %v205
    %v207 = vrot.slane %v102, %v206
    %v210 = vsel %vm119, %v201, 0
    %v213 = vsel %vm119, %v202, 0
    %215 = vmatprep.subr.mxu0 0.0
    %216 = vmatpush1.msra.mxu0 %v98
    %217 = vmatprep.subr.mxu0 0.0
    %218 = vmatpush1.msra.mxu0 %v99
    %219 = vmatprep.subr.mxu0 0.0
    %220 = vmatpush1.msra.mxu0 %v100
    %221 = vmatprep.subr.mxu0 0.0
    %222 = vmatpush1.msra.mxu0 %v101
    %223 = vmatprep.subr.mxu0 0.0
    %224 = vmatpush1.msra.mxu0 0.0
    %225 = vmatprep.subr.mxu0 0.0
    %226 = vmatpush1.msra.mxu0 0.0
    %227 = vmatprep.subr.mxu0 0.0
    %228 = vmatpush1.msra.mxu0 0.0
    %229 = vmatprep.subr.mxu0 0.0
    %230 = vmatpush1.msra.mxu0 0.0
    %231 = vmatprep.subr.mxu0 0.0
    %232 = vmatpush1.msra.mxu0 0.0
    %233 = vmatprep.subr.mxu0 0.0
    %234 = vmatpush1.msra.mxu0 0.0
    %235 = vmatprep.subr.mxu0 0.0
    %236 = vmatpush1.msra.mxu0 0.0
    %237 = vmatprep.subr.mxu0 0.0
    %238 = vmatpush1.msra.mxu0 0.0
    %239 = vmatprep.subr.mxu0 0.0
    %240 = vmatpush1.msra.mxu0 0.0
    %241 = vmatprep.subr.mxu0 0.0
    %242 = vmatpush1.msra.mxu0 0.0
    %243 = vmatprep.subr.mxu0 0.0
    %244 = vmatpush1.msra.mxu0 0.0
    %245 = vmatprep.subr.mxu0 0.0
    %246 = vmatpush1.msra.mxu0 0.0
    %247 = vmatprep.subr.mxu0 0.0
    %248 = vmatpush1.msra.mxu0 0.0
    %249 = vmatprep.subr.mxu0 0.0
    %250 = vmatpush1.msra.mxu0 0.0
    %251 = vmatprep.subr.mxu0 0.0
    %252 = vmatpush1.msra.mxu0 0.0
    %253 = vmatprep.subr.mxu0 0.0
    %254 = vmatpush1.msra.mxu0 0.0
    %255 = vmatprep.subr.mxu0 0.0
    %256 = vmatpush1.msra.mxu0 0.0
    %257 = vmatprep.subr.mxu0 0.0
    %258 = vmatpush1.msra.mxu0 0.0
    %259 = vmatprep.subr.mxu0 0.0
    %260 = vmatpush1.msra.mxu0 0.0
    %261 = vmatprep.subr.mxu0 0.0
    %262 = vmatpush1.msra.mxu0 0.0
    %263 = vmatprep.subr.mxu0 0.0
    %264 = vmatpush1.msra.mxu0 0.0
    %265 = vmatprep.subr.mxu0 0.0
    %266 = vmatpush1.msra.mxu0 0.0
    %267 = vmatprep.subr.mxu0 0.0
    %268 = vmatpush1.msra.mxu0 0.0
    %269 = vmatprep.subr.mxu0 0.0
    %270 = vmatpush1.msra.mxu0 0.0
    %271 = vmatprep.subr.mxu0 0.0
    %272 = vmatpush1.msra.mxu0 0.0
    %273 = vmatprep.subr.mxu0 0.0
    %274 = vmatpush1.msra.mxu0 0.0
    %275 = vmatprep.subr.mxu0 0.0
    %276 = vmatpush1.msra.mxu0 0.0
    %277 = vmatprep.subr.mxu0 0.0
    %278 = vmatpush1.msra.mxu0 0.0
    %279 = vmatprep.mubr.f32.mxu0 0.0
    %280 = vmatmul.mubr.f32.gmra.mrb[0].mxu0 %v210
    %v281 = vpop.f32.mrb[0].mxu0
    %v282 = vadd.f32 %v207, %v281
    %v283 = vpop.f32.mrb[0].mxu0
    %284 = vmatprep.mubr.f32.mxu0 0.0
    %285 = vmatmul.mubr.f32.gmra.mrb[0].mxu0 %v213
    %v286 = vpop.f32.mrb[0].mxu0
    %v287 = vadd.f32 %v207, %v286
    %v288 = vpop.f32.mrb[0].mxu0
    %289 = vdwg.mxu0
    %v290 = vmul.f32 %v193, %v282
    %v291 = vmul.f32 %v198, %v287
    %v293 = vsel %vm119, %v290, 0
    %v296 = vsel %vm119, %v291, 0
    %298 = vmatprep.subr.mxu0 0.0
    %299 = vmatpush1.msra.mxu0 %v108
    %300 = vmatprep.subr.mxu0 0.0
    %301 = vmatpush1.msra.mxu0 %v109
    %302 = vmatprep.subr.mxu0 0.0
    %303 = vmatpush1.msra.mxu0 %v110
    %304 = vmatprep.subr.mxu0 0.0
    %305 = vmatpush1.msra.mxu0 %v111
    %306 = vmatprep.subr.mxu0 0.0
    %307 = vmatpush1.msra.mxu0 0.0
    %308 = vmatprep.subr.mxu0 0.0
    %309 = vmatpush1.msra.mxu0 0.0
    %310 = vmatprep.subr.mxu0 0.0
    %311 = vmatpush1.msra.mxu0 0.0
    %312 = vmatprep.subr.mxu0 0.0
    %313 = vmatpush1.msra.mxu0 0.0
    %314 = vmatprep.subr.mxu0 0.0
    %315 = vmatpush1.msra.mxu0 0.0
    %316 = vmatprep.subr.mxu0 0.0
    %317 = vmatpush1.msra.mxu0 0.0
    %318 = vmatprep.subr.mxu0 0.0
    %319 = vmatpush1.msra.mxu0 0.0
    %320 = vmatprep.subr.mxu0 0.0
    %321 = vmatpush1.msra.mxu0 0.0
    %322 = vmatprep.subr.mxu0 0.0
    %323 = vmatpush1.msra.mxu0 0.0
    %324 = vmatprep.subr.mxu0 0.0
    %325 = vmatpush1.msra.mxu0 0.0
    %326 = vmatprep.subr.mxu0 0.0
    %327 = vmatpush1.msra.mxu0 0.0
    %328 = vmatprep.subr.mxu0 0.0
    %329 = vmatpush1.msra.mxu0 0.0
    %330 = vmatprep.subr.mxu0 0.0
    %331 = vmatpush1.msra.mxu0 0.0
    %332 = vmatprep.subr.mxu0 0.0
    %333 = vmatpush1.msra.mxu0 0.0
    %334 = vmatprep.subr.mxu0 0.0
    %335 = vmatpush1.msra.mxu0 0.0
    %336 = vmatprep.subr.mxu0 0.0
    %337 = vmatpush1.msra.mxu0 0.0
    %338 = vmatprep.subr.mxu0 0.0
    %339 = vmatpush1.msra.mxu0 0.0
    %340 = vmatprep.subr.mxu0 0.0
    %341 = vmatpush1.msra.mxu0 0.0
    %342 = vmatprep.subr.mxu0 0.0
    %343 = vmatpush1.msra.mxu0 0.0
    %344 = vmatprep.subr.mxu0 0.0
    %345 = vmatpush1.msra.mxu0 0.0
    %346 = vmatprep.subr.mxu0 0.0
    %347 = vmatpush1.msra.mxu0 0.0
    %348 = vmatprep.subr.mxu0 0.0
    %349 = vmatpush1.msra.mxu0 0.0
    %350 = vmatprep.subr.mxu0 0.0
    %351 = vmatpush1.msra.mxu0 0.0
    %352 = vmatprep.subr.mxu0 0.0
    %353 = vmatpush1.msra.mxu0 0.0
    %354 = vmatprep.subr.mxu0 0.0
    %355 = vmatpush1.msra.mxu0 0.0
    %356 = vmatprep.subr.mxu0 0.0
    %357 = vmatpush1.msra.mxu0 0.0
    %358 = vmatprep.subr.mxu0 0.0
    %359 = vmatpush1.msra.mxu0 0.0
    %360 = vmatprep.subr.mxu0 0.0
    %361 = vmatpush1.msra.mxu0 0.0
    %362 = vmatprep.mubr.f32.mxu0 0.0
    %363 = vmatmul.mubr.f32.gmra.mrb[0].mxu0 %v293
    %v364 = vpop.f32.mrb[0].mxu0
    %v365 = vadd.f32 0.0, %v364
    %v366 = vpop.f32.mrb[0].mxu0
    %367 = vmatprep.mubr.f32.mxu0 0.0
    %368 = vmatmul.mubr.f32.gmra.mrb[0].mxu0 %v296
    %v369 = vpop.f32.mrb[0].mxu0
    %v370 = vadd.f32 0.0, %v369
    %v371 = vpop.f32.mrb[0].mxu0
    %372 = vdwg.mxu0
    %s373 = scalar_lea.vmem [#allocation5], 16
    %v374 = vld [vmem:[%s373] sm:$0xff]
    %v375 = vld [vmem:[%s373 + $0x8] sm:$0xff]
    %v377 = vsel %vm119, %v374, 0
    %v380 = vsel %vm119, %v375, 0
    %382 = vmatprep.subr.mxu0 0.0
    %383 = vmatpush1.msra.mxu0 %v98
    %384 = vmatprep.subr.mxu0 0.0
    %385 = vmatpush1.msra.mxu0 %v99
    %386 = vmatprep.subr.mxu0 0.0
    %387 = vmatpush1.msra.mxu0 %v100
    %388 = vmatprep.subr.mxu0 0.0
    %389 = vmatpush1.msra.mxu0 %v101
    %390 = vmatprep.subr.mxu0 0.0
    %391 = vmatpush1.msra.mxu0 0.0
    %392 = vmatprep.subr.mxu0 0.0
    %393 = vmatpush1.msra.mxu0 0.0
    %394 = vmatprep.subr.mxu0 0.0
    %395 = vmatpush1.msra.mxu0 0.0
    %396 = vmatprep.subr.mxu0 0.0
    %397 = vmatpush1.msra.mxu0 0.0
    %398 = vmatprep.subr.mxu0 0.0
    %399 = vmatpush1.msra.mxu0 0.0
    %400 = vmatprep.subr.mxu0 0.0
    %401 = vmatpush1.msra.mxu0 0.0
    %402 = vmatprep.subr.mxu0 0.0
    %403 = vmatpush1.msra.mxu0 0.0
    %404 = vmatprep.subr.mxu0 0.0
    %405 = vmatpush1.msra.mxu0 0.0
    %406 = vmatprep.subr.mxu0 0.0
    %407 = vmatpush1.msra.mxu0 0.0
    %408 = vmatprep.subr.mxu0 0.0
    %409 = vmatpush1.msra.mxu0 0.0
    %410 = vmatprep.subr.mxu0 0.0
    %411 = vmatpush1.msra.mxu0 0.0
    %412 = vmatprep.subr.mxu0 0.0
    %413 = vmatpush1.msra.mxu0 0.0
    %414 = vmatprep.subr.mxu0 0.0
    %415 = vmatpush1.msra.mxu0 0.0
    %416 = vmatprep.subr.mxu0 0.0
    %417 = vmatpush1.msra.mxu0 0.0
    %418 = vmatprep.subr.mxu0 0.0
    %419 = vmatpush1.msra.mxu0 0.0
    %420 = vmatprep.subr.mxu0 0.0
    %421 = vmatpush1.msra.mxu0 0.0
    %422 = vmatprep.subr.mxu0 0.0
    %423 = vmatpush1.msra.mxu0 0.0
    %424 = vmatprep.subr.mxu0 0.0
    %425 = vmatpush1.msra.mxu0 0.0
    %426 = vmatprep.subr.mxu0 0.0
    %427 = vmatpush1.msra.mxu0 0.0
    %428 = vmatprep.subr.mxu0 0.0
    %429 = vmatpush1.msra.mxu0 0.0
    %430 = vmatprep.subr.mxu0 0.0
    %431 = vmatpush1.msra.mxu0 0.0
    %432 = vmatprep.subr.mxu0 0.0
    %433 = vmatpush1.msra.mxu0 0.0
    %434 = vmatprep.subr.mxu0 0.0
    %435 = vmatpush1.msra.mxu0 0.0
    %436 = vmatprep.subr.mxu0 0.0
    %437 = vmatpush1.msra.mxu0 0.0
    %438 = vmatprep.subr.mxu0 0.0
    %439 = vmatpush1.msra.mxu0 0.0
    %440 = vmatprep.subr.mxu0 0.0
    %441 = vmatpush1.msra.mxu0 0.0
    %442 = vmatprep.subr.mxu0 0.0
    %443 = vmatpush1.msra.mxu0 0.0
    %444 = vmatprep.subr.mxu0 0.0
    %445 = vmatpush1.msra.mxu0 0.0
    %446 = vmatprep.mubr.f32.mxu0 0.0
    %447 = vmatmul.mubr.f32.gmra.mrb[0].mxu0 %v377
    %v448 = vpop.f32.mrb[0].mxu0
    %v449 = vadd.f32 %v207, %v448
    %v450 = vpop.f32.mrb[0].mxu0
    %451 = vmatprep.mubr.f32.mxu0 0.0
    %452 = vmatmul.mubr.f32.gmra.mrb[0].mxu0 %v380
    %v453 = vpop.f32.mrb[0].mxu0
    %v454 = vadd.f32 %v207, %v453
    %v455 = vpop.f32.mrb[0].mxu0
    %456 = vdwg.mxu0
    %v457 = vmul.f32 %v193, %v449
    %v458 = vmul.f32 %v198, %v454
    %v460 = vsel %vm119, %v457, 0
    %v463 = vsel %vm119, %v458, 0
    %465 = vmatprep.subr.mxu0 0.0
    %466 = vmatpush1.msra.mxu0 %v108
    %467 = vmatprep.subr.mxu0 0.0
    %468 = vmatpush1.msra.mxu0 %v109
    %469 = vmatprep.subr.mxu0 0.0
    %470 = vmatpush1.msra.mxu0 %v110
    %471 = vmatprep.subr.mxu0 0.0
    %472 = vmatpush1.msra.mxu0 %v111
    %473 = vmatprep.subr.mxu0 0.0
    %474 = vmatpush1.msra.mxu0 0.0
    %475 = vmatprep.subr.mxu0 0.0
    %476 = vmatpush1.msra.mxu0 0.0
    %477 = vmatprep.subr.mxu0 0.0
    %478 = vmatpush1.msra.mxu0 0.0
    %479 = vmatprep.subr.mxu0 0.0
    %480 = vmatpush1.msra.mxu0 0.0
    %481 = vmatprep.subr.mxu0 0.0
    %482 = vmatpush1.msra.mxu0 0.0
    %483 = vmatprep.subr.mxu0 0.0
    %484 = vmatpush1.msra.mxu0 0.0
    %485 = vmatprep.subr.mxu0 0.0
    %486 = vmatpush1.msra.mxu0 0.0
    %487 = vmatprep.subr.mxu0 0.0
    %488 = vmatpush1.msra.mxu0 0.0
    %489 = vmatprep.subr.mxu0 0.0
    %490 = vmatpush1.msra.mxu0 0.0
    %491 = vmatprep.subr.mxu0 0.0
    %492 = vmatpush1.msra.mxu0 0.0
    %493 = vmatprep.subr.mxu0 0.0
    %494 = vmatpush1.msra.mxu0 0.0
    %495 = vmatprep.subr.mxu0 0.0
    %496 = vmatpush1.msra.mxu0 0.0
    %497 = vmatprep.subr.mxu0 0.0
    %498 = vmatpush1.msra.mxu0 0.0
    %499 = vmatprep.subr.mxu0 0.0
    %500 = vmatpush1.msra.mxu0 0.0
    %501 = vmatprep.subr.mxu0 0.0
    %502 = vmatpush1.msra.mxu0 0.0
    %503 = vmatprep.subr.mxu0 0.0
    %504 = vmatpush1.msra.mxu0 0.0
    %505 = vmatprep.subr.mxu0 0.0
    %506 = vmatpush1.msra.mxu0 0.0
    %507 = vmatprep.subr.mxu0 0.0
    %508 = vmatpush1.msra.mxu0 0.0
    %509 = vmatprep.subr.mxu0 0.0
    %510 = vmatpush1.msra.mxu0 0.0
    %511 = vmatprep.subr.mxu0 0.0
    %512 = vmatpush1.msra.mxu0 0.0
    %513 = vmatprep.subr.mxu0 0.0
    %514 = vmatpush1.msra.mxu0 0.0
    %515 = vmatprep.subr.mxu0 0.0
    %516 = vmatpush1.msra.mxu0 0.0
    %517 = vmatprep.subr.mxu0 0.0
    %518 = vmatpush1.msra.mxu0 0.0
    %519 = vmatprep.subr.mxu0 0.0
    %520 = vmatpush1.msra.mxu0 0.0
    %521 = vmatprep.subr.mxu0 0.0
    %522 = vmatpush1.msra.mxu0 0.0
    %523 = vmatprep.subr.mxu0 0.0
    %524 = vmatpush1.msra.mxu0 0.0
    %525 = vmatprep.subr.mxu0 0.0
    %526 = vmatpush1.msra.mxu0 0.0
    %527 = vmatprep.subr.mxu0 0.0
    %528 = vmatpush1.msra.mxu0 0.0
    %529 = vmatprep.mubr.f32.mxu0 0.0
    %530 = vmatmul.mubr.f32.gmra.mrb[0].mxu0 %v460
    %v531 = vpop.f32.mrb[0].mxu0
    %v532 = vadd.f32 0.0, %v531
    %v533 = vpop.f32.mrb[0].mxu0
    %534 = vmatprep.mubr.f32.mxu0 0.0
    %535 = vmatmul.mubr.f32.gmra.mrb[0].mxu0 %v463
    %v536 = vpop.f32.mrb[0].mxu0
    %v537 = vadd.f32 0.0, %v536
    %v538 = vpop.f32.mrb[0].mxu0
    %539 = vdwg.mxu0
    %s540 = scalar_lea.vmem [#allocation5], 32
    %v541 = vld [vmem:[%s540] sm:$0xff]
    %v542 = vld [vmem:[%s540 + $0x8] sm:$0xff]
    %v544 = vsel %vm119, %v541, 0
    %v547 = vsel %vm119, %v542, 0
    %549 = vmatprep.subr.mxu0 0.0
    %550 = vmatpush1.msra.mxu0 %v98
    %551 = vmatprep.subr.mxu0 0.0
    %552 = vmatpush1.msra.mxu0 %v99
    %553 = vmatprep.subr.mxu0 0.0
    %554 = vmatpush1.msra.mxu0 %v100
    %555 = vmatprep.subr.mxu0 0.0
    %556 = vmatpush1.msra.mxu0 %v101
    %557 = vmatprep.subr.mxu0 0.0
    %558 = vmatpush1.msra.mxu0 0.0
    %559 = vmatprep.subr.mxu0 0.0
    %560 = vmatpush1.msra.mxu0 0.0
    %561 = vmatprep.subr.mxu0 0.0
    %562 = vmatpush1.msra.mxu0 0.0
    %563 = vmatprep.subr.mxu0 0.0
    %564 = vmatpush1.msra.mxu0 0.0
    %565 = vmatprep.subr.mxu0 0.0
    %566 = vmatpush1.msra.mxu0 0.0
    %567 = vmatprep.subr.mxu0 0.0
    %568 = vmatpush1.msra.mxu0 0.0
    %569 = vmatprep.subr.mxu0 0.0
    %570 = vmatpush1.msra.mxu0 0.0
    %571 = vmatprep.subr.mxu0 0.0
    %572 = vmatpush1.msra.mxu0 0.0
    %573 = vmatprep.subr.mxu0 0.0
    %574 = vmatpush1.msra.mxu0 0.0
    %575 = vmatprep.subr.mxu0 0.0
    %576 = vmatpush1.msra.mxu0 0.0
    %577 = vmatprep.subr.mxu0 0.0
    %578 = vmatpush1.msra.mxu0 0.0
    %579 = vmatprep.subr.mxu0 0.0
    %580 = vmatpush1.msra.mxu0 0.0
    %581 = vmatprep.subr.mxu0 0.0
    %582 = vmatpush1.msra.mxu0 0.0
    %583 = vmatprep.subr.mxu0 0.0
    %584 = vmatpush1.msra.mxu0 0.0
    %585 = vmatprep.subr.mxu0 0.0
    %586 = vmatpush1.msra.mxu0 0.0
    %587 = vmatprep.subr.mxu0 0.0
    %588 = vmatpush1.msra.mxu0 0.0
    %589 = vmatprep.subr.mxu0 0.0
    %590 = vmatpush1.msra.mxu0 0.0
    %591 = vmatprep.subr.mxu0 0.0
    %592 = vmatpush1.msra.mxu0 0.0
    %593 = vmatprep.subr.mxu0 0.0
    %594 = vmatpush1.msra.mxu0 0.0
    %595 = vmatprep.subr.mxu0 0.0
    %596 = vmatpush1.msra.mxu0 0.0
    %597 = vmatprep.subr.mxu0 0.0
    %598 = vmatpush1.msra.mxu0 0.0
    %599 = vmatprep.subr.mxu0 0.0
    %600 = vmatpush1.msra.mxu0 0.0
    %601 = vmatprep.subr.mxu0 0.0
    %602 = vmatpush1.msra.mxu0 0.0
    %603 = vmatprep.subr.mxu0 0.0
    %604 = vmatpush1.msra.mxu0 0.0
    %605 = vmatprep.subr.mxu0 0.0
    %606 = vmatpush1.msra.mxu0 0.0
    %607 = vmatprep.subr.mxu0 0.0
    %608 = vmatpush1.msra.mxu0 0.0
    %609 = vmatprep.subr.mxu0 0.0
    %610 = vmatpush1.msra.mxu0 0.0
    %611 = vmatprep.subr.mxu0 0.0
    %612 = vmatpush1.msra.mxu0 0.0
    %613 = vmatprep.mubr.f32.mxu0 0.0
    %614 = vmatmul.mubr.f32.gmra.mrb[0].mxu0 %v544
    %v615 = vpop.f32.mrb[0].mxu0
    %v616 = vadd.f32 %v207, %v615
    %v617 = vpop.f32.mrb[0].mxu0
    %618 = vmatprep.mubr.f32.mxu0 0.0
    %619 = vmatmul.mubr.f32.gmra.mrb[0].mxu0 %v547
    %v620 = vpop.f32.mrb[0].mxu0
    %v621 = vadd.f32 %v207, %v620
    %v622 = vpop.f32.mrb[0].mxu0
    %623 = vdwg.mxu0
    %v624 = vmul.f32 %v193, %v616
    %v625 = vmul.f32 %v198, %v621
    %v627 = vsel %vm119, %v624, 0
    %v630 = vsel %vm119, %v625, 0
    %632 = vmatprep.subr.mxu0 0.0
    %633 = vmatpush1.msra.mxu0 %v108
    %634 = vmatprep.subr.mxu0 0.0
    %635 = vmatpush1.msra.mxu0 %v109
    %636 = vmatprep.subr.mxu0 0.0
    %637 = vmatpush1.msra.mxu0 %v110
    %638 = vmatprep.subr.mxu0 0.0
    %639 = vmatpush1.msra.mxu0 %v111
    %640 = vmatprep.subr.mxu0 0.0
    %641 = vmatpush1.msra.mxu0 0.0
    %642 = vmatprep.subr.mxu0 0.0
    %643 = vmatpush1.msra.mxu0 0.0
    %644 = vmatprep.subr.mxu0 0.0
    %645 = vmatpush1.msra.mxu0 0.0
    %646 = vmatprep.subr.mxu0 0.0
    %647 = vmatpush1.msra.mxu0 0.0
    %648 = vmatprep.subr.mxu0 0.0
    %649 = vmatpush1.msra.mxu0 0.0
    %650 = vmatprep.subr.mxu0 0.0
    %651 = vmatpush1.msra.mxu0 0.0
    %652 = vmatprep.subr.mxu0 0.0
    %653 = vmatpush1.msra.mxu0 0.0
    %654 = vmatprep.subr.mxu0 0.0
    %655 = vmatpush1.msra.mxu0 0.0
    %656 = vmatprep.subr.mxu0 0.0
    %657 = vmatpush1.msra.mxu0 0.0
    %658 = vmatprep.subr.mxu0 0.0
    %659 = vmatpush1.msra.mxu0 0.0
    %660 = vmatprep.subr.mxu0 0.0
    %661 = vmatpush1.msra.mxu0 0.0
    %662 = vmatprep.subr.mxu0 0.0
    %663 = vmatpush1.msra.mxu0 0.0
    %664 = vmatprep.subr.mxu0 0.0
    %665 = vmatpush1.msra.mxu0 0.0
    %666 = vmatprep.subr.mxu0 0.0
    %667 = vmatpush1.msra.mxu0 0.0
    %668 = vmatprep.subr.mxu0 0.0
    %669 = vmatpush1.msra.mxu0 0.0
    %670 = vmatprep.subr.mxu0 0.0
    %671 = vmatpush1.msra.mxu0 0.0
    %672 = vmatprep.subr.mxu0 0.0
    %673 = vmatpush1.msra.mxu0 0.0
    %674 = vmatprep.subr.mxu0 0.0
    %675 = vmatpush1.msra.mxu0 0.0
    %676 = vmatprep.subr.mxu0 0.0
    %677 = vmatpush1.msra.mxu0 0.0
    %678 = vmatprep.subr.mxu0 0.0
    %679 = vmatpush1.msra.mxu0 0.0
    %680 = vmatprep.subr.mxu0 0.0
    %681 = vmatpush1.msra.mxu0 0.0
    %682 = vmatprep.subr.mxu0 0.0
    %683 = vmatpush1.msra.mxu0 0.0
    %684 = vmatprep.subr.mxu0 0.0
    %685 = vmatpush1.msra.mxu0 0.0
    %686 = vmatprep.subr.mxu0 0.0
    %687 = vmatpush1.msra.mxu0 0.0
    %688 = vmatprep.subr.mxu0 0.0
    %689 = vmatpush1.msra.mxu0 0.0
    %690 = vmatprep.subr.mxu0 0.0
    %691 = vmatpush1.msra.mxu0 0.0
    %692 = vmatprep.subr.mxu0 0.0
    %693 = vmatpush1.msra.mxu0 0.0
    %694 = vmatprep.subr.mxu0 0.0
    %695 = vmatpush1.msra.mxu0 0.0
    %696 = vmatprep.mubr.f32.mxu0 0.0
    %697 = vmatmul.mubr.f32.gmra.mrb[0].mxu0 %v627
    %v698 = vpop.f32.mrb[0].mxu0
    %v699 = vadd.f32 0.0, %v698
    %v700 = vpop.f32.mrb[0].mxu0
    %701 = vmatprep.mubr.f32.mxu0 0.0
    %702 = vmatmul.mubr.f32.gmra.mrb[0].mxu0 %v630
    %v703 = vpop.f32.mrb[0].mxu0
    %v704 = vadd.f32 0.0, %v703
    %v705 = vpop.f32.mrb[0].mxu0
    %706 = vdwg.mxu0
    %s707 = scalar_lea.vmem [#allocation5], 48
    %v708 = vld [vmem:[%s707] sm:$0xff]
    %v709 = vld [vmem:[%s707 + $0x8] sm:$0xff]
    %v711 = vsel %vm119, %v708, 0
    %v714 = vsel %vm119, %v709, 0
    %716 = vmatprep.subr.mxu0 0.0
    %717 = vmatpush1.msra.mxu0 %v98
    %718 = vmatprep.subr.mxu0 0.0
    %719 = vmatpush1.msra.mxu0 %v99
    %720 = vmatprep.subr.mxu0 0.0
    %721 = vmatpush1.msra.mxu0 %v100
    %722 = vmatprep.subr.mxu0 0.0
    %723 = vmatpush1.msra.mxu0 %v101
    %724 = vmatprep.subr.mxu0 0.0
    %725 = vmatpush1.msra.mxu0 0.0
    %726 = vmatprep.subr.mxu0 0.0
    %727 = vmatpush1.msra.mxu0 0.0
    %728 = vmatprep.subr.mxu0 0.0
    %729 = vmatpush1.msra.mxu0 0.0
    %730 = vmatprep.subr.mxu0 0.0
    %731 = vmatpush1.msra.mxu0 0.0
    %732 = vmatprep.subr.mxu0 0.0
    %733 = vmatpush1.msra.mxu0 0.0
    %734 = vmatprep.subr.mxu0 0.0
    %735 = vmatpush1.msra.mxu0 0.0
    %736 = vmatprep.subr.mxu0 0.0
    %737 = vmatpush1.msra.mxu0 0.0
    %738 = vmatprep.subr.mxu0 0.0
    %739 = vmatpush1.msra.mxu0 0.0
    %740 = vmatprep.subr.mxu0 0.0
    %741 = vmatpush1.msra.mxu0 0.0
    %742 = vmatprep.subr.mxu0 0.0
    %743 = vmatpush1.msra.mxu0 0.0
    %744 = vmatprep.subr.mxu0 0.0
    %745 = vmatpush1.msra.mxu0 0.0
    %746 = vmatprep.subr.mxu0 0.0
    %747 = vmatpush1.msra.mxu0 0.0
    %748 = vmatprep.subr.mxu0 0.0
    %749 = vmatpush1.msra.mxu0 0.0
    %750 = vmatprep.subr.mxu0 0.0
    %751 = vmatpush1.msra.mxu0 0.0
    %752 = vmatprep.subr.mxu0 0.0
    %753 = vmatpush1.msra.mxu0 0.0
    %754 = vmatprep.subr.mxu0 0.0
    %755 = vmatpush1.msra.mxu0 0.0
    %756 = vmatprep.subr.mxu0 0.0
    %757 = vmatpush1.msra.mxu0 0.0
    %758 = vmatprep.subr.mxu0 0.0
    %759 = vmatpush1.msra.mxu0 0.0
    %760 = vmatprep.subr.mxu0 0.0
    %761 = vmatpush1.msra.mxu0 0.0
    %762 = vmatprep.subr.mxu0 0.0
    %763 = vmatpush1.msra.mxu0 0.0
    %764 = vmatprep.subr.mxu0 0.0
    %765 = vmatpush1.msra.mxu0 0.0
    %766 = vmatprep.subr.mxu0 0.0
    %767 = vmatpush1.msra.mxu0 0.0
    %768 = vmatprep.subr.mxu0 0.0
    %769 = vmatpush1.msra.mxu0 0.0
    %770 = vmatprep.subr.mxu0 0.0
    %771 = vmatpush1.msra.mxu0 0.0
    %772 = vmatprep.subr.mxu0 0.0
    %773 = vmatpush1.msra.mxu0 0.0
    %774 = vmatprep.subr.mxu0 0.0
    %775 = vmatpush1.msra.mxu0 0.0
    %776 = vmatprep.subr.mxu0 0.0
    %777 = vmatpush1.msra.mxu0 0.0
    %778 = vmatprep.subr.mxu0 0.0
    %779 = vmatpush1.msra.mxu0 0.0
    %780 = vmatprep.mubr.f32.mxu0 0.0
    %781 = vmatmul.mubr.f32.gmra.mrb[0].mxu0 %v711
    %v782 = vpop.f32.mrb[0].mxu0
    %v783 = vadd.f32 %v207, %v782
    %v784 = vpop.f32.mrb[0].mxu0
    %785 = vmatprep.mubr.f32.mxu0 0.0
    %786 = vmatmul.mubr.f32.gmra.mrb[0].mxu0 %v714
    %v787 = vpop.f32.mrb[0].mxu0
    %v788 = vadd.f32 %v207, %v787
    %v789 = vpop.f32.mrb[0].mxu0
    %790 = vdwg.mxu0
    %v791 = vmul.f32 %v193, %v783
    %v792 = vmul.f32 %v198, %v788
    %v794 = vsel %vm119, %v791, 0
    %v797 = vsel %vm119, %v792, 0
    %799 = vmatprep.subr.mxu0 0.0
    %800 = vmatpush1.msra.mxu0 %v108
    %801 = vmatprep.subr.mxu0 0.0
    %802 = vmatpush1.msra.mxu0 %v109
    %803 = vmatprep.subr.mxu0 0.0
    %804 = vmatpush1.msra.mxu0 %v110
    %805 = vmatprep.subr.mxu0 0.0
    %806 = vmatpush1.msra.mxu0 %v111
    %807 = vmatprep.subr.mxu0 0.0
    %808 = vmatpush1.msra.mxu0 0.0
    %809 = vmatprep.subr.mxu0 0.0
    %810 = vmatpush1.msra.mxu0 0.0
    %811 = vmatprep.subr.mxu0 0.0
    %812 = vmatpush1.msra.mxu0 0.0
    %813 = vmatprep.subr.mxu0 0.0
    %814 = vmatpush1.msra.mxu0 0.0
    %815 = vmatprep.subr.mxu0 0.0
    %816 = vmatpush1.msra.mxu0 0.0
    %817 = vmatprep.subr.mxu0 0.0
    %818 = vmatpush1.msra.mxu0 0.0
    %819 = vmatprep.subr.mxu0 0.0
    %820 = vmatpush1.msra.mxu0 0.0
    %821 = vmatprep.subr.mxu0 0.0
    %822 = vmatpush1.msra.mxu0 0.0
    %823 = vmatprep.subr.mxu0 0.0
    %824 = vmatpush1.msra.mxu0 0.0
    %825 = vmatprep.subr.mxu0 0.0
    %826 = vmatpush1.msra.mxu0 0.0
    %827 = vmatprep.subr.mxu0 0.0
    %828 = vmatpush1.msra.mxu0 0.0
    %829 = vmatprep.subr.mxu0 0.0
    %830 = vmatpush1.msra.mxu0 0.0
    %831 = vmatprep.subr.mxu0 0.0
    %832 = vmatpush1.msra.mxu0 0.0
    %833 = vmatprep.subr.mxu0 0.0
    %834 = vmatpush1.msra.mxu0 0.0
    %835 = vmatprep.subr.mxu0 0.0
    %836 = vmatpush1.msra.mxu0 0.0
    %837 = vmatprep.subr.mxu0 0.0
    %838 = vmatpush1.msra.mxu0 0.0
    %839 = vmatprep.subr.mxu0 0.0
    %840 = vmatpush1.msra.mxu0 0.0
    %841 = vmatprep.subr.mxu0 0.0
    %842 = vmatpush1.msra.mxu0 0.0
    %843 = vmatprep.subr.mxu0 0.0
    %844 = vmatpush1.msra.mxu0 0.0
    %845 = vmatprep.subr.mxu0 0.0
    %846 = vmatpush1.msra.mxu0 0.0
    %847 = vmatprep.subr.mxu0 0.0
    %848 = vmatpush1.msra.mxu0 0.0
    %849 = vmatprep.subr.mxu0 0.0
    %850 = vmatpush1.msra.mxu0 0.0
    %851 = vmatprep.subr.mxu0 0.0
    %852 = vmatpush1.msra.mxu0 0.0
    %853 = vmatprep.subr.mxu0 0.0
    %854 = vmatpush1.msra.mxu0 0.0
    %855 = vmatprep.subr.mxu0 0.0
    %856 = vmatpush1.msra.mxu0 0.0
    %857 = vmatprep.subr.mxu0 0.0
    %858 = vmatpush1.msra.mxu0 0.0
    %859 = vmatprep.subr.mxu0 0.0
    %860 = vmatpush1.msra.mxu0 0.0
    %861 = vmatprep.subr.mxu0 0.0
    %862 = vmatpush1.msra.mxu0 0.0
    %863 = vmatprep.mubr.f32.mxu0 0.0
    %864 = vmatmul.mubr.f32.gmra.mrb[0].mxu0 %v794
    %v865 = vpop.f32.mrb[0].mxu0
    %v866 = vadd.f32 0.0, %v865
    %v867 = vpop.f32.mrb[0].mxu0
    %868 = vmatprep.mubr.f32.mxu0 0.0
    %869 = vmatmul.mubr.f32.gmra.mrb[0].mxu0 %v797
    %v870 = vpop.f32.mrb[0].mxu0
    %v871 = vadd.f32 0.0, %v870
    %v872 = vpop.f32.mrb[0].mxu0
    %873 = vdwg.mxu0
    %v874 = vmax.f32 %v365, %v532
    %v875 = vmax.f32 %v370, %v537
    %v876 = vmax.f32 %v874, %v699
    %v877 = vmax.f32 %v875, %v704
    %v878 = vmax.f32 %v876, %v866
    %v879 = vmax.f32 %v877, %v871
    %v880 = vsub.f32 %v365, %v878
    %v881 = vsub.f32 %v370, %v879
    %v882 = vmul.f32 %v880, 1.442695
    %v883 = vpow.pop %v882
    %v884 = vmul.f32 %v881, 1.442695
    %v885 = vpow.pop %v884
    %v886 = vsub.f32 %v532, %v878
    %v887 = vsub.f32 %v537, %v879
    %v888 = vmul.f32 %v886, 1.442695
    %v889 = vpow.pop %v888
    %v890 = vmul.f32 %v887, 1.442695
    %v891 = vpow.pop %v890
    %v892 = vsub.f32 %v699, %v878
    %v893 = vsub.f32 %v704, %v879
    %v894 = vmul.f32 %v892, 1.442695
    %v895 = vpow.pop %v894
    %v896 = vmul.f32 %v893, 1.442695
    %v897 = vpow.pop %v896
    %v898 = vsub.f32 %v866, %v878
    %v899 = vsub.f32 %v871, %v879
    %v900 = vmul.f32 %v898, 1.442695
    %v901 = vpow.pop %v900
    %v902 = vmul.f32 %v899, 1.442695
    %v903 = vpow.pop %v902
    %v904 = vadd.f32 %v883, %v889
    %v905 = vadd.f32 %v885, %v891
    %v906 = vadd.f32 %v904, %v895
    %v907 = vadd.f32 %v905, %v897
    %v908 = vadd.f32 %v906, %v901
    %v909 = vadd.f32 %v907, %v903
    %v910 = vrcp.pop %v908
    %v911 = vrcp.pop %v909
    %v912 = vmul.f32 %v883, %v910
    %v913 = vmul.f32 %v885, %v911
    %vm914 = vcmask 31744
    %v916 = vsel %vm914, %v912, 0
    %v919 = vsel %vm914, %v913, 0
    %vm921 = vcmask 1043456
    %v923 = vsel %vm921, %v112, 0
    %925 = vmatprep.subr.mxu0 0.0
    %926 = vmatpush1.msra.mxu0 %v923
    %927 = vmatprep.subr.mxu0 0.0
    %928 = vmatpush1.msra.mxu0 0.0
    %929 = vmatprep.subr.mxu0 0.0
    %930 = vmatpush1.msra.mxu0 0.0
    %931 = vmatprep.subr.mxu0 0.0
    %932 = vmatpush1.msra.mxu0 0.0
    %933 = vmatprep.subr.mxu0 0.0
    %934 = vmatpush1.msra.mxu0 0.0
    %935 = vmatprep.subr.mxu0 0.0
    %936 = vmatpush1.msra.mxu0 0.0
    %937 = vmatprep.subr.mxu0 0.0
    %938 = vmatpush1.msra.mxu0 0.0
    %939 = vmatprep.subr.mxu0 0.0
    %940 = vmatpush1.msra.mxu0 0.0
    %941 = vmatprep.subr.mxu0 0.0
    %942 = vmatpush1.msra.mxu0 0.0
    %943 = vmatprep.subr.mxu0 0.0
    %944 = vmatpush1.msra.mxu0 0.0
    %945 = vmatprep.subr.mxu0 0.0
    %946 = vmatpush1.msra.mxu0 0.0
    %947 = vmatprep.subr.mxu0 0.0
    %948 = vmatpush1.msra.mxu0 0.0
    %949 = vmatprep.subr.mxu0 0.0
    %950 = vmatpush1.msra.mxu0 0.0
    %951 = vmatprep.subr.mxu0 0.0
    %952 = vmatpush1.msra.mxu0 0.0
    %953 = vmatprep.subr.mxu0 0.0
    %954 = vmatpush1.msra.mxu0 0.0
    %955 = vmatprep.subr.mxu0 0.0
    %956 = vmatpush1.msra.mxu0 0.0
    %957 = vmatprep.subr.mxu0 0.0
    %958 = vmatpush1.msra.mxu0 0.0
    %959 = vmatprep.subr.mxu0 0.0
    %960 = vmatpush1.msra.mxu0 0.0
    %961 = vmatprep.subr.mxu0 0.0
    %962 = vmatpush1.msra.mxu0 0.0
    %963 = vmatprep.subr.mxu0 0.0
    %964 = vmatpush1.msra.mxu0 0.0
    %965 = vmatprep.subr.mxu0 0.0
    %966 = vmatpush1.msra.mxu0 0.0
    %967 = vmatprep.subr.mxu0 0.0
    %968 = vmatpush1.msra.mxu0 0.0
    %969 = vmatprep.subr.mxu0 0.0
    %970 = vmatpush1.msra.mxu0 0.0
    %971 = vmatprep.subr.mxu0 0.0
    %972 = vmatpush1.msra.mxu0 0.0
    %973 = vmatprep.subr.mxu0 0.0
    %974 = vmatpush1.msra.mxu0 0.0
    %975 = vmatprep.subr.mxu0 0.0
    %976 = vmatpush1.msra.mxu0 0.0
    %977 = vmatprep.subr.mxu0 0.0
    %978 = vmatpush1.msra.mxu0 0.0
    %979 = vmatprep.subr.mxu0 0.0
    %980 = vmatpush1.msra.mxu0 0.0
    %981 = vmatprep.subr.mxu0 0.0
    %982 = vmatpush1.msra.mxu0 0.0
    %983 = vmatprep.subr.mxu0 0.0
    %984 = vmatpush1.msra.mxu0 0.0
    %985 = vmatprep.subr.mxu0 0.0
    %986 = vmatpush1.msra.mxu0 0.0
    %987 = vmatprep.subr.mxu0 0.0
    %988 = vmatpush1.msra.mxu0 0.0
    %989 = vmatprep.mubr.f32.mxu0 0.0
    %990 = vmatmul.mubr.f32.gmra.mrb[0].mxu0 %v916
    %v991 = vpop.f32.mrb[0].mxu0
    %v992 = vadd.f32 0.0, %v991
    %v993 = vpop.f32.mrb[0].mxu0
    %994 = vmatprep.mubr.f32.mxu0 0.0
    %995 = vmatmul.mubr.f32.gmra.mrb[0].mxu0 %v919
    %v996 = vpop.f32.mrb[0].mxu0
    %v997 = vadd.f32 0.0, %v996
    %v998 = vpop.f32.mrb[0].mxu0
    %999 = vdwg.mxu0
    %1002 = vrot.lane.b32.xlu0 %v282, 96
    %v1003 = vpop.permute.xlu0 %1002
    %1004 = vrot.lane.b32.xlu0 %v287, 96
    %v1005 = vpop.permute.xlu0 %1004
    %v1008 = vmul.f32 %v992, %v1003
    %v1009 = vmul.f32 %v997, %v1005
    %v1010 = vmul.f32 %v889, %v910
    %v1011 = vmul.f32 %v891, %v911
    %v1013 = vsel %vm914, %v1010, 0
    %v1016 = vsel %vm914, %v1011, 0
    %1018 = vmatprep.subr.mxu0 0.0
    %1019 = vmatpush1.msra.mxu0 %v923
    %1020 = vmatprep.subr.mxu0 0.0
    %1021 = vmatpush1.msra.mxu0 0.0
    %1022 = vmatprep.subr.mxu0 0.0
    %1023 = vmatpush1.msra.mxu0 0.0
    %1024 = vmatprep.subr.mxu0 0.0
    %1025 = vmatpush1.msra.mxu0 0.0
    %1026 = vmatprep.subr.mxu0 0.0
    %1027 = vmatpush1.msra.mxu0 0.0
    %1028 = vmatprep.subr.mxu0 0.0
    %1029 = vmatpush1.msra.mxu0 0.0
    %1030 = vmatprep.subr.mxu0 0.0
    %1031 = vmatpush1.msra.mxu0 0.0
    %1032 = vmatprep.subr.mxu0 0.0
    %1033 = vmatpush1.msra.mxu0 0.0
    %1034 = vmatprep.subr.mxu0 0.0
    %1035 = vmatpush1.msra.mxu0 0.0
    %1036 = vmatprep.subr.mxu0 0.0
    %1037 = vmatpush1.msra.mxu0 0.0
    %1038 = vmatprep.subr.mxu0 0.0
    %1039 = vmatpush1.msra.mxu0 0.0
    %1040 = vmatprep.subr.mxu0 0.0
    %1041 = vmatpush1.msra.mxu0 0.0
    %1042 = vmatprep.subr.mxu0 0.0
    %1043 = vmatpush1.msra.mxu0 0.0
    %1044 = vmatprep.subr.mxu0 0.0
    %1045 = vmatpush1.msra.mxu0 0.0
    %1046 = vmatprep.subr.mxu0 0.0
    %1047 = vmatpush1.msra.mxu0 0.0
    %1048 = vmatprep.subr.mxu0 0.0
    %1049 = vmatpush1.msra.mxu0 0.0
    %1050 = vmatprep.subr.mxu0 0.0
    %1051 = vmatpush1.msra.mxu0 0.0
    %1052 = vmatprep.subr.mxu0 0.0
    %1053 = vmatpush1.msra.mxu0 0.0
    %1054 = vmatprep.subr.mxu0 0.0
    %1055 = vmatpush1.msra.mxu0 0.0
    %1056 = vmatprep.subr.mxu0 0.0
    %1057 = vmatpush1.msra.mxu0 0.0
    %1058 = vmatprep.subr.mxu0 0.0
    %1059 = vmatpush1.msra.mxu0 0.0
    %1060 = vmatprep.subr.mxu0 0.0
    %1061 = vmatpush1.msra.mxu0 0.0
    %1062 = vmatprep.subr.mxu0 0.0
    %1063 = vmatpush1.msra.mxu0 0.0
    %1064 = vmatprep.subr.mxu0 0.0
    %1065 = vmatpush1.msra.mxu0 0.0
    %1066 = vmatprep.subr.mxu0 0.0
    %1067 = vmatpush1.msra.mxu0 0.0
    %1068 = vmatprep.subr.mxu0 0.0
    %1069 = vmatpush1.msra.mxu0 0.0
    %1070 = vmatprep.subr.mxu0 0.0
    %1071 = vmatpush1.msra.mxu0 0.0
    %1072 = vmatprep.subr.mxu0 0.0
    %1073 = vmatpush1.msra.mxu0 0.0
    %1074 = vmatprep.subr.mxu0 0.0
    %1075 = vmatpush1.msra.mxu0 0.0
    %1076 = vmatprep.subr.mxu0 0.0
    %1077 = vmatpush1.msra.mxu0 0.0
    %1078 = vmatprep.subr.mxu0 0.0
    %1079 = vmatpush1.msra.mxu0 0.0
    %1080 = vmatprep.subr.mxu0 0.0
    %1081 = vmatpush1.msra.mxu0 0.0
    %1082 = vmatprep.mubr.f32.mxu0 0.0
    %1083 = vmatmul.mubr.f32.gmra.mrb[0].mxu0 %v1013
    %v1084 = vpop.f32.mrb[0].mxu0
    %v1085 = vadd.f32 0.0, %v1084
    %v1086 = vpop.f32.mrb[0].mxu0
    %1087 = vmatprep.mubr.f32.mxu0 0.0
    %1088 = vmatmul.mubr.f32.gmra.mrb[0].mxu0 %v1016
    %v1089 = vpop.f32.mrb[0].mxu0
    %v1090 = vadd.f32 0.0, %v1089
    %v1091 = vpop.f32.mrb[0].mxu0
    %1092 = vdwg.mxu0
    %1095 = vrot.lane.b32.xlu0 %v449, 96
    %v1096 = vpop.permute.xlu0 %1095
    %1097 = vrot.lane.b32.xlu0 %v454, 96
    %v1098 = vpop.permute.xlu0 %1097
    %v1101 = vmul.f32 %v1085, %v1096
    %v1102 = vmul.f32 %v1090, %v1098
    %v1103 = vadd.f32 %v1008, %v1101
    %v1104 = vadd.f32 %v1009, %v1102
    %v1105 = vmul.f32 %v895, %v910
    %v1106 = vmul.f32 %v897, %v911
    %v1108 = vsel %vm914, %v1105, 0
    %v1111 = vsel %vm914, %v1106, 0
    %1113 = vmatprep.subr.mxu0 0.0
    %1114 = vmatpush1.msra.mxu0 %v923
    %1115 = vmatprep.subr.mxu0 0.0
    %1116 = vmatpush1.msra.mxu0 0.0
    %1117 = vmatprep.subr.mxu0 0.0
    %1118 = vmatpush1.msra.mxu0 0.0
    %1119 = vmatprep.subr.mxu0 0.0
    %1120 = vmatpush1.msra.mxu0 0.0
    %1121 = vmatprep.subr.mxu0 0.0
    %1122 = vmatpush1.msra.mxu0 0.0
    %1123 = vmatprep.subr.mxu0 0.0
    %1124 = vmatpush1.msra.mxu0 0.0
    %1125 = vmatprep.subr.mxu0 0.0
    %1126 = vmatpush1.msra.mxu0 0.0
    %1127 = vmatprep.subr.mxu0 0.0
    %1128 = vmatpush1.msra.mxu0 0.0
    %1129 = vmatprep.subr.mxu0 0.0
    %1130 = vmatpush1.msra.mxu0 0.0
    %1131 = vmatprep.subr.mxu0 0.0
    %1132 = vmatpush1.msra.mxu0 0.0
    %1133 = vmatprep.subr.mxu0 0.0
    %1134 = vmatpush1.msra.mxu0 0.0
    %1135 = vmatprep.subr.mxu0 0.0
    %1136 = vmatpush1.msra.mxu0 0.0
    %1137 = vmatprep.subr.mxu0 0.0
    %1138 = vmatpush1.msra.mxu0 0.0
    %1139 = vmatprep.subr.mxu0 0.0
    %1140 = vmatpush1.msra.mxu0 0.0
    %1141 = vmatprep.subr.mxu0 0.0
    %1142 = vmatpush1.msra.mxu0 0.0
    %1143 = vmatprep.subr.mxu0 0.0
    %1144 = vmatpush1.msra.mxu0 0.0
    %1145 = vmatprep.subr.mxu0 0.0
    %1146 = vmatpush1.msra.mxu0 0.0
    %1147 = vmatprep.subr.mxu0 0.0
    %1148 = vmatpush1.msra.mxu0 0.0
    %1149 = vmatprep.subr.mxu0 0.0
    %1150 = vmatpush1.msra.mxu0 0.0
    %1151 = vmatprep.subr.mxu0 0.0
    %1152 = vmatpush1.msra.mxu0 0.0
    %1153 = vmatprep.subr.mxu0 0.0
    %1154 = vmatpush1.msra.mxu0 0.0
    %1155 = vmatprep.subr.mxu0 0.0
    %1156 = vmatpush1.msra.mxu0 0.0
    %1157 = vmatprep.subr.mxu0 0.0
    %1158 = vmatpush1.msra.mxu0 0.0
    %1159 = vmatprep.subr.mxu0 0.0
    %1160 = vmatpush1.msra.mxu0 0.0
    %1161 = vmatprep.subr.mxu0 0.0
    %1162 = vmatpush1.msra.mxu0 0.0
    %1163 = vmatprep.subr.mxu0 0.0
    %1164 = vmatpush1.msra.mxu0 0.0
    %1165 = vmatprep.subr.mxu0 0.0
    %1166 = vmatpush1.msra.mxu0 0.0
    %1167 = vmatprep.subr.mxu0 0.0
    %1168 = vmatpush1.msra.mxu0 0.0
    %1169 = vmatprep.subr.mxu0 0.0
    %1170 = vmatpush1.msra.mxu0 0.0
    %1171 = vmatprep.subr.mxu0 0.0
    %1172 = vmatpush1.msra.mxu0 0.0
    %1173 = vmatprep.subr.mxu0 0.0
    %1174 = vmatpush1.msra.mxu0 0.0
    %1175 = vmatprep.subr.mxu0 0.0
    %1176 = vmatpush1.msra.mxu0 0.0
    %1177 = vmatprep.mubr.f32.mxu0 0.0
    %1178 = vmatmul.mubr.f32.gmra.mrb[0].mxu0 %v1108
    %v1179 = vpop.f32.mrb[0].mxu0
    %v1180 = vadd.f32 0.0, %v1179
    %v1181 = vpop.f32.mrb[0].mxu0
    %1182 = vmatprep.mubr.f32.mxu0 0.0
    %1183 = vmatmul.mubr.f32.gmra.mrb[0].mxu0 %v1111
    %v1184 = vpop.f32.mrb[0].mxu0
    %v1185 = vadd.f32 0.0, %v1184
    %v1186 = vpop.f32.mrb[0].mxu0
    %1187 = vdwg.mxu0
    %1190 = vrot.lane.b32.xlu0 %v616, 96
    %v1191 = vpop.permute.xlu0 %1190
    %1192 = vrot.lane.b32.xlu0 %v621, 96
    %v1193 = vpop.permute.xlu0 %1192
    %v1196 = vmul.f32 %v1180, %v1191
    %v1197 = vmul.f32 %v1185, %v1193
    %v1198 = vadd.f32 %v1103, %v1196
    %v1199 = vadd.f32 %v1104, %v1197
    %v1200 = vmul.f32 %v901, %v910
    %v1201 = vmul.f32 %v903, %v911
    %v1203 = vsel %vm914, %v1200, 0
    %v1206 = vsel %vm914, %v1201, 0
    %1208 = vmatprep.subr.mxu0 0.0
    %1209 = vmatpush1.msra.mxu0 %v923
    %1210 = vmatprep.subr.mxu0 0.0
    %1211 = vmatpush1.msra.mxu0 0.0
    %1212 = vmatprep.subr.mxu0 0.0
    %1213 = vmatpush1.msra.mxu0 0.0
    %1214 = vmatprep.subr.mxu0 0.0
    %1215 = vmatpush1.msra.mxu0 0.0
    %1216 = vmatprep.subr.mxu0 0.0
    %1217 = vmatpush1.msra.mxu0 0.0
    %1218 = vmatprep.subr.mxu0 0.0
    %1219 = vmatpush1.msra.mxu0 0.0
    %1220 = vmatprep.subr.mxu0 0.0
    %1221 = vmatpush1.msra.mxu0 0.0
    %1222 = vmatprep.subr.mxu0 0.0
    %1223 = vmatpush1.msra.mxu0 0.0
    %1224 = vmatprep.subr.mxu0 0.0
    %1225 = vmatpush1.msra.mxu0 0.0
    %1226 = vmatprep.subr.mxu0 0.0
    %1227 = vmatpush1.msra.mxu0 0.0
    %1228 = vmatprep.subr.mxu0 0.0
    %1229 = vmatpush1.msra.mxu0 0.0
    %1230 = vmatprep.subr.mxu0 0.0
    %1231 = vmatpush1.msra.mxu0 0.0
    %1232 = vmatprep.subr.mxu0 0.0
    %1233 = vmatpush1.msra.mxu0 0.0
    %1234 = vmatprep.subr.mxu0 0.0
    %1235 = vmatpush1.msra.mxu0 0.0
    %1236 = vmatprep.subr.mxu0 0.0
    %1237 = vmatpush1.msra.mxu0 0.0
    %1238 = vmatprep.subr.mxu0 0.0
    %1239 = vmatpush1.msra.mxu0 0.0
    %1240 = vmatprep.subr.mxu0 0.0
    %1241 = vmatpush1.msra.mxu0 0.0
    %1242 = vmatprep.subr.mxu0 0.0
    %1243 = vmatpush1.msra.mxu0 0.0
    %1244 = vmatprep.subr.mxu0 0.0
    %1245 = vmatpush1.msra.mxu0 0.0
    %1246 = vmatprep.subr.mxu0 0.0
    %1247 = vmatpush1.msra.mxu0 0.0
    %1248 = vmatprep.subr.mxu0 0.0
    %1249 = vmatpush1.msra.mxu0 0.0
    %1250 = vmatprep.subr.mxu0 0.0
    %1251 = vmatpush1.msra.mxu0 0.0
    %1252 = vmatprep.subr.mxu0 0.0
    %1253 = vmatpush1.msra.mxu0 0.0
    %1254 = vmatprep.subr.mxu0 0.0
    %1255 = vmatpush1.msra.mxu0 0.0
    %1256 = vmatprep.subr.mxu0 0.0
    %1257 = vmatpush1.msra.mxu0 0.0
    %1258 = vmatprep.subr.mxu0 0.0
    %1259 = vmatpush1.msra.mxu0 0.0
    %1260 = vmatprep.subr.mxu0 0.0
    %1261 = vmatpush1.msra.mxu0 0.0
    %1262 = vmatprep.subr.mxu0 0.0
    %1263 = vmatpush1.msra.mxu0 0.0
    %1264 = vmatprep.subr.mxu0 0.0
    %1265 = vmatpush1.msra.mxu0 0.0
    %1266 = vmatprep.subr.mxu0 0.0
    %1267 = vmatpush1.msra.mxu0 0.0
    %1268 = vmatprep.subr.mxu0 0.0
    %1269 = vmatpush1.msra.mxu0 0.0
    %1270 = vmatprep.subr.mxu0 0.0
    %1271 = vmatpush1.msra.mxu0 0.0
    %1272 = vmatprep.mubr.f32.mxu0 0.0
    %1273 = vmatmul.mubr.f32.gmra.mrb[0].mxu0 %v1203
    %v1274 = vpop.f32.mrb[0].mxu0
    %v1275 = vadd.f32 0.0, %v1274
    %v1276 = vpop.f32.mrb[0].mxu0
    %1277 = vmatprep.mubr.f32.mxu0 0.0
    %1278 = vmatmul.mubr.f32.gmra.mrb[0].mxu0 %v1206
    %v1279 = vpop.f32.mrb[0].mxu0
    %v1280 = vadd.f32 0.0, %v1279
    %v1281 = vpop.f32.mrb[0].mxu0
    %1282 = vdwg.mxu0
    %1285 = vrot.lane.b32.xlu0 %v783, 96
    %v1286 = vpop.permute.xlu0 %1285
    %1287 = vrot.lane.b32.xlu0 %v788, 96
    %v1288 = vpop.permute.xlu0 %1287
    %v1291 = vmul.f32 %v1275, %v1286
    %v1292 = vmul.f32 %v1280, %v1288
    %v1293 = vadd.f32 %v1198, %v1291
    %v1294 = vadd.f32 %v1199, %v1292
    %v1296 = vlaneseq
    %v1297 = vshrl.u32 %v1296, 7
    %v1298 = vsub.s32 0, %v1297
    %v1299 = vrot.slane %v107, %v1298
    %v1302 = vsel %vm119, %v1293, 0
    %v1305 = vsel %vm119, %v1294, 0
    %1307 = vmatprep.subr.mxu0 0.0
    %1308 = vmatpush1.msra.mxu0 %v103
    %1309 = vmatprep.subr.mxu0 0.0
    %1310 = vmatpush1.msra.mxu0 %v104
    %1311 = vmatprep.subr.mxu0 0.0
    %1312 = vmatpush1.msra.mxu0 %v105
    %1313 = vmatprep.subr.mxu0 0.0
    %1314 = vmatpush1.msra.mxu0 %v106
    %1315 = vmatprep.subr.mxu0 0.0
    %1316 = vmatpush1.msra.mxu0 0.0
    %1317 = vmatprep.subr.mxu0 0.0
    %1318 = vmatpush1.msra.mxu0 0.0
    %1319 = vmatprep.subr.mxu0 0.0
    %1320 = vmatpush1.msra.mxu0 0.0
    %1321 = vmatprep.subr.mxu0 0.0
    %1322 = vmatpush1.msra.mxu0 0.0
    %1323 = vmatprep.subr.mxu0 0.0
    %1324 = vmatpush1.msra.mxu0 0.0
    %1325 = vmatprep.subr.mxu0 0.0
    %1326 = vmatpush1.msra.mxu0 0.0
    %1327 = vmatprep.subr.mxu0 0.0
    %1328 = vmatpush1.msra.mxu0 0.0
    %1329 = vmatprep.subr.mxu0 0.0
    %1330 = vmatpush1.msra.mxu0 0.0
    %1331 = vmatprep.subr.mxu0 0.0
    %1332 = vmatpush1.msra.mxu0 0.0
    %1333 = vmatprep.subr.mxu0 0.0
    %1334 = vmatpush1.msra.mxu0 0.0
    %1335 = vmatprep.subr.mxu0 0.0
    %1336 = vmatpush1.msra.mxu0 0.0
    %1337 = vmatprep.subr.mxu0 0.0
    %1338 = vmatpush1.msra.mxu0 0.0
    %1339 = vmatprep.subr.mxu0 0.0
    %1340 = vmatpush1.msra.mxu0 0.0
    %1341 = vmatprep.subr.mxu0 0.0
    %1342 = vmatpush1.msra.mxu0 0.0
    %1343 = vmatprep.subr.mxu0 0.0
    %1344 = vmatpush1.msra.mxu0 0.0
    %1345 = vmatprep.subr.mxu0 0.0
    %1346 = vmatpush1.msra.mxu0 0.0
    %1347 = vmatprep.subr.mxu0 0.0
    %1348 = vmatpush1.msra.mxu0 0.0
    %1349 = vmatprep.subr.mxu0 0.0
    %1350 = vmatpush1.msra.mxu0 0.0
    %1351 = vmatprep.subr.mxu0 0.0
    %1352 = vmatpush1.msra.mxu0 0.0
    %1353 = vmatprep.subr.mxu0 0.0
    %1354 = vmatpush1.msra.mxu0 0.0
    %1355 = vmatprep.subr.mxu0 0.0
    %1356 = vmatpush1.msra.mxu0 0.0
    %1357 = vmatprep.subr.mxu0 0.0
    %1358 = vmatpush1.msra.mxu0 0.0
    %1359 = vmatprep.subr.mxu0 0.0
    %1360 = vmatpush1.msra.mxu0 0.0
    %1361 = vmatprep.subr.mxu0 0.0
    %1362 = vmatpush1.msra.mxu0 0.0
    %1363 = vmatprep.subr.mxu0 0.0
    %1364 = vmatpush1.msra.mxu0 0.0
    %1365 = vmatprep.subr.mxu0 0.0
    %1366 = vmatpush1.msra.mxu0 0.0
    %1367 = vmatprep.subr.mxu0 0.0
    %1368 = vmatpush1.msra.mxu0 0.0
    %1369 = vmatprep.subr.mxu0 0.0
    %1370 = vmatpush1.msra.mxu0 0.0
    %1371 = vmatprep.mubr.f32.mxu0 0.0
    %1372 = vmatmul.mubr.f32.gmra.mrb[0].mxu0 %v1302
    %v1373 = vpop.f32.mrb[0].mxu0
    %v1374 = vadd.f32 %v1299, %v1373
    %v1375 = vpop.f32.mrb[0].mxu0
    %1376 = vmatprep.mubr.f32.mxu0 0.0
    %1377 = vmatmul.mubr.f32.gmra.mrb[0].mxu0 %v1305
    %v1378 = vpop.f32.mrb[0].mxu0
    %v1379 = vadd.f32 %v1299, %v1378
    %v1380 = vpop.f32.mrb[0].mxu0
    %1381 = vdwg.mxu0
    %1382 = vst.msk [vmem:[#allocation10] sm:$0xff] %vm119, %v1374
    %1383 = vst.msk [vmem:[#allocation10 + $0x8] sm:$0xff] %vm119, %v1379
    // Predicated region
    $region58: #{tpu_custom_call.1} parent=1 // pred_check
      _
    $region59: #{tpu_custom_call.1} parent=1 // pred_check_branch
      %1385 = sbr.rel (0) target = $region61
    $region60: #{tpu_custom_call.1} parent=1 // pred_region
      %s1387 = ssub.s32 256, 256
      %1388 = vsyncadd [#allocation4], %s1387
      %s1389 = sshll.u32 [#allocation10], 4
      %s1390 = int_to_ptr.vmem [resolvable:$true] %s1389
      %1395 = dma.vmem_to_hbm [thread:$0]  %s1390, 256, %s10, [#allocation4], 128, 128, 8
    $region61: #{tpu_custom_call.1} parent=1 // pred_fallthru
      _
    // Predicated region
    $region62: #{tpu_custom_call.1} parent=1 // pred_check
      _
    $region63: #{tpu_custom_call.1} parent=1 // pred_check_branch
      %1397 = sbr.rel (0) target = $region65
    $region64: #{tpu_custom_call.1} parent=1 // pred_region
      %1398 = dma.done [#allocation4], 256
    $region65: #{tpu_custom_call.1} parent=1 // pred_fallthru
      _
    %1399 = vsyncpa [#allocation3], 1
    %1400 = vsyncpa [#allocation6], 1
    %1401 = vsyncpa [#allocation9], 1
    %1402 = vsyncpa [#allocation4], 1

</llo_original>
